<compile_context>
chip_gen: v6e
topology: v6e:2x2x1
jax: 0.10.0
libtpu: 0.0.40
codegen_flags: <defaults>
</compile_context>

<pallas_src>
import jax
import jax.numpy as jnp
import numpy as np
from jax import lax
from jax.experimental import pallas as pl
from jax.experimental.pallas import tpu as pltpu

NEG_SLOPE = 0.01  # nn.LeakyReLU default negative_slope


def _act(g, tanh_mask):
    # One full-width EUP push per step.  The sigmoid-gate columns of g were
    # pre-scaled by 0.5 on the host, so sigmoid(x) = 0.5*tanh(x/2) + 0.5 here.
    t = jnp.tanh(g)
    return jnp.where(tanh_mask, t, 0.5 * t + 0.5)


def prevae_lstm_kernel(x_ref, fc_slab_ref, lstm_slab_ref, out_ref, gbias_ref):
    S, D_in = x_ref.shape
    D_fc = fc_slab_ref.shape[1]
    G = lstm_slab_ref.shape[1]          # 4 * (H1 + H2), gate-major layout
    HH = G // 4                         # H1 + H2 (fused state width)
    H2 = out_ref.shape[1]

    # fc: Linear (+ Dropout, identity at inference) + LeakyReLU.
    f = jnp.dot(x_ref[...], fc_slab_ref[0:D_in, :],
                preferred_element_type=jnp.float32) + fc_slab_ref[D_in:D_in + 1, :]
    f = jnp.where(f >= 0.0, f, NEG_SLOPE * f)

    # LSTM1 input pre-activations for every timestep, written straight into a
    # VMEM scratch (one row per wavefront iteration).  Row S is the wavefront
    # tail row whose layer-1 lanes are never consumed.
    wih1_t = lstm_slab_ref[HH:HH + D_fc, :]                # (D_fc, G), layer-2 cols 0
    b_comb = lstm_slab_ref[HH + D_fc:HH + D_fc + 1, :]     # (1, G)
    gbias_ref[0:S, :] = jnp.dot(f, wih1_t,
                                preferred_element_type=jnp.float32) + b_comb
    gbias_ref[S:S + 1, :] = b_comb

    # Fused recurrence weight, loaded once and held in vregs across the loop.
    w_rec = lstm_slab_ref[0:HH, :]                         # (HH, G)

    lane = lax.broadcasted_iota(jnp.int32, (1, G), 1)
    tanh_mask = (lane >= 2 * HH) & (lane < 3 * HH)         # the "g" gate slot
    lane_hh = lax.broadcasted_iota(jnp.int32, (1, HH), 1)
    l1_only = (lane_hh >= H2).astype(jnp.float32)          # layer-1 state lanes

    # t == 0: layer-1 at time 0 only.  All initial states are zero, so the
    # recurrent matmul is skipped; the layer-2 half of c is masked to 0, which
    # also makes h2 = o2 * tanh(0) = 0.
    act = _act(gbias_ref[0:1, :], tanh_mask)
    c = (act[:, 0:HH] * act[:, 2 * HH:3 * HH]) * l1_only   # [c2=0 | c1_0]
    h = act[:, 3 * HH:4 * HH] * jnp.tanh(c)                # [h2=0 | h1_0]

    # Skewed wavefront, fully unrolled (S static & small): iteration t runs
    # layer-1 at time t (t < S) and layer-2 at time t-1 with one fused MXU push
    # and one G-wide tanh.  At t == S the layer-1 half is junk and never read.
    # TODO(synk): switch to lax.fori_loop with carried (h, c) for large S.
    for t in range(1, S + 1):
        g = jnp.dot(h, w_rec,
                    preferred_element_type=jnp.float32) + gbias_ref[t:t + 1, :]
        act = _act(g, tanh_mask)
        c = act[:, HH:2 * HH] * c + act[:, 0:HH] * act[:, 2 * HH:3 * HH]
        h = act[:, 3 * HH:4 * HH] * jnp.tanh(c)            # [h2_{t-1} | h1_t]
        out_ref[t - 1:t, :] = h[:, 0:H2]                   # store h2_{t-1}


def _gate_major(block2, block1):
    """Interleave per-layer PyTorch [i,f,g,o] blocks into
    [i2 i1 | f2 f1 | g2 g1 | o2 o1] (layer-2 lanes first within each gate)."""
    H2 = block2.shape[-1] // 4
    H1 = block1.shape[-1] // 4
    cols = []
    for k in range(4):
        cols.append(block2[..., k * H2:(k + 1) * H2])
        cols.append(block1[..., k * H1:(k + 1) * H1])
    return jnp.concatenate(cols, axis=-1)


def prevae_lstm_forward(x, params):
    S, D_in = x.shape
    H1 = params['whh1'].shape[1]
    H2 = params['whh2'].shape[1]
    HH = H1 + H2
    D_fc = params['wfc'].shape[0]
    G = 4 * HH
    f32 = jnp.float32

    # Contract checks (b1/b2 are the pre-summed b_ih + b_hh; unbatched input).
    assert params['wfc'].shape == (D_fc, D_in)
    assert params['wih1'].shape == (4 * H1, D_fc)
    assert params['wih2'].shape == (4 * H2, H1)
    assert params['b1'].shape == (1, 4 * H1) and params['b2'].shape == (1, 4 * H2)

    # fc slab: [wfc.T ; bfc]  ->  (D_in + 1, D_fc).
    fc_slab = jnp.concatenate(
        [params['wfc'].T.astype(f32),
         params['bfc'].reshape(1, D_fc).astype(f32)], axis=0)

    # Single-tanh trick: pre-scale the sigmoid-gate (i, f, o) columns of every
    # pre-activation source by 0.5 (exact, power of two).
    col = np.arange(G)
    gate_scale = jnp.asarray(
        np.where((col >= 2 * HH) & (col < 3 * HH), 1.0, 0.5), dtype=f32)[None, :]

    # Fused gate-major recurrence weight for h = [h2_{t-2} | h1_{t-1}]:
    #   rows 0:H2  (from h2): whh2 -> layer-2 gates, zeros -> layer-1 gates
    #   rows H2:HH (from h1): wih2 -> layer-2 gates, whh1 -> layer-1 gates
    w_rec_top = _gate_major(params['whh2'].T.astype(f32),
                            jnp.zeros((H2, 4 * H1), f32))
    w_rec_bot = _gate_major(params['wih2'].T.astype(f32),
                            params['whh1'].T.astype(f32))
    w_rec = jnp.concatenate([w_rec_top, w_rec_bot], axis=0) * gate_scale

    # LSTM1 input weight / combined biases, padded to the fused gate layout.
    wih1_t = _gate_major(jnp.zeros((D_fc, 4 * H2), f32),
                         params['wih1'].T.astype(f32)) * gate_scale
    b_comb = _gate_major(params['b2'].astype(f32),
                         params['b1'].astype(f32)) * gate_scale

    # One LSTM slab -> one prologue DMA instead of five separate ones.
    lstm_slab = jnp.concatenate([w_rec, wih1_t, b_comb], axis=0)  # (HH+D_fc+1, G)

    vmem = pl.BlockSpec(memory_space=pltpu.MemorySpace.VMEM)
    return pl.pallas_call(
        prevae_lstm_kernel,
        out_shape=jax.ShapeDtypeStruct((S, H2), jnp.float32),
        in_specs=[vmem, vmem, vmem],
        out_specs=vmem,
        scratch_shapes=[pltpu.VMEM((S + 1, G), jnp.float32)],
    )(x.astype(f32), fc_slab, lstm_slab)


def reference(x, params):
    """Pure-JAX reference matching PyTorch semantics (eval-mode dropout)."""
    f = x @ params['wfc'].T + params['bfc']
    f = jnp.where(f >= 0.0, f, NEG_SLOPE * f)

    def run_lstm(inp, wih, whh, b):
        H = whh.shape[1]
        gx = inp @ wih.T + b                                # (S, 4H)

        def step(carry, g_t):
            h, c = carry
            g = g_t[None, :] + h @ whh.T
            i = jax.nn.sigmoid(g[:, 0:H])
            fg = jax.nn.sigmoid(g[:, H:2 * H])
            gg = jnp.tanh(g[:, 2 * H:3 * H])
            o = jax.nn.sigmoid(g[:, 3 * H:4 * H])
            c = fg * c + i * gg
            h = o * jnp.tanh(c)
            return (h, c), h[0]

        init = (jnp.zeros((1, H), jnp.float32), jnp.zeros((1, H), jnp.float32))
        _, hs = lax.scan(step, init, gx)
        return hs                                           # (S, H)

    h1 = run_lstm(f, params['wih1'], params['whh1'], params['b1'])
    h2 = run_lstm(h1, params['wih2'], params['whh2'], params['b2'])
    return h2


if __name__ == "__main__":
    # Small shapes consistent with the module's forward:
    #   x: (seq=8, fc_input_dim=16), fc_output_dim=32, LSTM1_hidden=32, LSTM2_hidden=32
    S, D_in, D_fc, H1, H2 = 8, 16, 32, 32, 32

    key = jax.random.PRNGKey(0)
    ks = jax.random.split(key, 10)
    params = {
        # nn.Linear(fc_input_dim, fc_output_dim): weight (out, in), bias (out,)
        'wfc':  0.1 * jax.random.normal(ks[0], (D_fc, D_in), jnp.float32),
        'bfc':  0.1 * jax.random.normal(ks[1], (1, D_fc), jnp.float32),
        # nn.LSTM layer 1: weight_ih_l0 (4H1, D_fc), weight_hh_l0 (4H1, H1)
        'wih1': 0.1 * jax.random.normal(ks[2], (4 * H1, D_fc), jnp.float32),
        'whh1': 0.1 * jax.random.normal(ks[3], (4 * H1, H1), jnp.float32),
        # combined b_ih_l0 + b_hh_l0, stored as (1, 4H1)
        'b1':   0.1 * jax.random.normal(ks[4], (1, 4 * H1), jnp.float32),
        # nn.LSTM layer 2: weight_ih_l0 (4H2, H1), weight_hh_l0 (4H2, H2)
        'wih2': 0.1 * jax.random.normal(ks[5], (4 * H2, H1), jnp.float32),
        'whh2': 0.1 * jax.random.normal(ks[6], (4 * H2, H2), jnp.float32),
        'b2':   0.1 * jax.random.normal(ks[7], (1, 4 * H2), jnp.float32),
    }
    x = jax.random.normal(ks[8], (S, D_in), jnp.float32)

    out = prevae_lstm_forward(x, params)
    jax.block_until_ready(out)

    ref = reference(x, params)
    np.testing.assert_allclose(np.asarray(out), np.asarray(ref),
                               rtol=1e-4, atol=1e-4)
    assert out.shape == (S, H2) and out.dtype == jnp.float32
    print("KERNEL_OK")
</pallas_src>

<mosaic_0001>
module attributes {stable_mosaic.version = 11 : i64} {
  func.func @prevae_lstm_kernel(%arg0: memref<8x16xf32, #tpu.memory_space<vmem>>, %arg1: memref<17x32xf32, #tpu.memory_space<vmem>>, %arg2: memref<97x256xf32, #tpu.memory_space<vmem>>, %arg3: memref<8x32xf32, #tpu.memory_space<vmem>>, %arg4: memref<9x256xf32, #tpu.memory_space<vmem>>) attributes {dimension_semantics = [], scalar_prefetch = 0 : i64, scratch_operands = 1 : i64, tpu.core_type = #tpu.core_type<tc>} {
    %c0 = arith.constant 0 : index
    %c0_0 = arith.constant 0 : index
    %0 = vector.load %arg0[%c0, %c0_0] : memref<8x16xf32, #tpu.memory_space<vmem>>, vector<8x16xf32>
    %c0_1 = arith.constant 0 : index
    %c0_2 = arith.constant 0 : index
    %1 = vector.load %arg1[%c0_1, %c0_2] : memref<17x32xf32, #tpu.memory_space<vmem>>, vector<16x32xf32>
    %cst = arith.constant dense<0.000000e+00> : vector<8x32xf32>
    %2 = tpu.matmul %0, %1, %cst {dimension_numbers = #tpu.dot_dimension_numbers<[1], [0], [0], [1], [0, 0, 1, 1], [], []>} : vector<8x16xf32>, vector<16x32xf32>, vector<8x32xf32> -> vector<8x32xf32>
    %c16 = arith.constant 16 : index
    %c0_3 = arith.constant 0 : index
    %3 = vector.load %arg1[%c16, %c0_3] : memref<17x32xf32, #tpu.memory_space<vmem>>, vector<1x32xf32>
    %4 = vector.broadcast %3 : vector<1x32xf32> to vector<8x32xf32>
    %5 = arith.addf %2, %4 : vector<8x32xf32>
    %cst_4 = arith.constant 0.000000e+00 : f32
    %6 = vector.broadcast %cst_4 : f32 to vector<8x32xf32>
    %7 = arith.cmpf oge, %5, %6 : vector<8x32xf32>
    %cst_5 = arith.constant 0.00999999977 : f32
    %8 = vector.broadcast %cst_5 : f32 to vector<8x32xf32>
    %9 = arith.mulf %8, %5 : vector<8x32xf32>
    %10 = arith.select %7, %5, %9 : vector<8x32xi1>, vector<8x32xf32>
    %c64 = arith.constant 64 : index
    %c0_6 = arith.constant 0 : index
    %11 = vector.load %arg2[%c64, %c0_6] : memref<97x256xf32, #tpu.memory_space<vmem>>, vector<32x256xf32>
    %c96 = arith.constant 96 : index
    %c0_7 = arith.constant 0 : index
    %12 = vector.load %arg2[%c96, %c0_7] : memref<97x256xf32, #tpu.memory_space<vmem>>, vector<1x256xf32>
    %cst_8 = arith.constant dense<0.000000e+00> : vector<8x256xf32>
    %13 = tpu.matmul %10, %11, %cst_8 {dimension_numbers = #tpu.dot_dimension_numbers<[1], [0], [0], [1], [0, 0, 1, 1], [], []>} : vector<8x32xf32>, vector<32x256xf32>, vector<8x256xf32> -> vector<8x256xf32>
    %14 = vector.broadcast %12 : vector<1x256xf32> to vector<8x256xf32>
    %15 = arith.addf %13, %14 : vector<8x256xf32>
    %c0_9 = arith.constant 0 : index
    %c0_10 = arith.constant 0 : index
    %16 = vector.load %arg4[%c0_9, %c0_10] : memref<9x256xf32, #tpu.memory_space<vmem>>, vector<8x256xf32>
    tpu.vector_store %arg4[%c0_9, %c0_10], %15 {strides = array<i32>} : memref<9x256xf32, #tpu.memory_space<vmem>>, vector<8x256xf32>,
    %c8 = arith.constant 8 : index
    %c0_11 = arith.constant 0 : index
    %17 = vector.load %arg4[%c8, %c0_11] : memref<9x256xf32, #tpu.memory_space<vmem>>, vector<1x256xf32>
    tpu.vector_store %arg4[%c8, %c0_11], %12 {strides = array<i32>} : memref<9x256xf32, #tpu.memory_space<vmem>>, vector<1x256xf32>,
    %c0_12 = arith.constant 0 : index
    %c0_13 = arith.constant 0 : index
    %18 = vector.load %arg2[%c0_12, %c0_13] : memref<97x256xf32, #tpu.memory_space<vmem>>, vector<64x256xf32>
    %19 = tpu.iota {dimensions = array<i32: 1>} : vector<1x256xi32>
    %c128_i32 = arith.constant 128 : i32
    %20 = vector.broadcast %c128_i32 : i32 to vector<1x256xi32>
    %21 = arith.cmpi sge, %19, %20 : vector<1x256xi32>
    %c192_i32 = arith.constant 192 : i32
    %22 = vector.broadcast %c192_i32 : i32 to vector<1x256xi32>
    %23 = arith.cmpi slt, %19, %22 : vector<1x256xi32>
    %24 = arith.andi %21, %23 : vector<1x256xi1>
    %25 = tpu.iota {dimensions = array<i32: 1>} : vector<1x64xi32>
    %c32_i32 = arith.constant 32 : i32
    %26 = vector.broadcast %c32_i32 : i32 to vector<1x64xi32>
    %27 = arith.cmpi sge, %25, %26 : vector<1x64xi32>
    %28 = arith.extui %27 : vector<1x64xi1> to vector<1x64xi32>
    %29 = arith.sitofp %28 : vector<1x64xi32> to vector<1x64xf32>
    %c0_14 = arith.constant 0 : index
    %c0_15 = arith.constant 0 : index
    %30 = vector.load %arg4[%c0_14, %c0_15] : memref<9x256xf32, #tpu.memory_space<vmem>>, vector<1x256xf32>
    %31 = math.tanh %30 : vector<1x256xf32>
    %cst_16 = arith.constant 5.000000e-01 : f32
    %32 = vector.broadcast %cst_16 : f32 to vector<1x256xf32>
    %33 = arith.mulf %32, %31 : vector<1x256xf32>
    %cst_17 = arith.constant 5.000000e-01 : f32
    %34 = vector.broadcast %cst_17 : f32 to vector<1x256xf32>
    %35 = arith.addf %33, %34 : vector<1x256xf32>
    %36 = arith.select %24, %31, %35 : vector<1x256xi1>, vector<1x256xf32>
    %37 = vector.extract_strided_slice %36 {offsets = [0, 0], sizes = [1, 64], strides = [1, 1]} : vector<1x256xf32> to vector<1x64xf32>
    %38 = vector.extract_strided_slice %36 {offsets = [0, 128], sizes = [1, 64], strides = [1, 1]} : vector<1x256xf32> to vector<1x64xf32>
    %39 = arith.mulf %37, %38 : vector<1x64xf32>
    %40 = arith.mulf %39, %29 : vector<1x64xf32>
    %41 = vector.extract_strided_slice %36 {offsets = [0, 192], sizes = [1, 64], strides = [1, 1]} : vector<1x256xf32> to vector<1x64xf32>
    %42 = math.tanh %40 : vector<1x64xf32>
    %43 = arith.mulf %41, %42 : vector<1x64xf32>
    %cst_18 = arith.constant dense<0.000000e+00> : vector<1x256xf32>
    %44 = tpu.matmul %43, %18, %cst_18 {dimension_numbers = #tpu.dot_dimension_numbers<[1], [0], [0], [1], [0, 0, 1, 1], [], []>} : vector<1x64xf32>, vector<64x256xf32>, vector<1x256xf32> -> vector<1x256xf32>
    %c1 = arith.constant 1 : index
    %c0_19 = arith.constant 0 : index
    %45 = vector.load %arg4[%c1, %c0_19] : memref<9x256xf32, #tpu.memory_space<vmem>>, vector<1x256xf32>
    %46 = arith.addf %44, %45 : vector<1x256xf32>
    %47 = math.tanh %46 : vector<1x256xf32>
    %cst_20 = arith.constant 5.000000e-01 : f32
    %48 = vector.broadcast %cst_20 : f32 to vector<1x256xf32>
    %49 = arith.mulf %48, %47 : vector<1x256xf32>
    %cst_21 = arith.constant 5.000000e-01 : f32
    %50 = vector.broadcast %cst_21 : f32 to vector<1x256xf32>
    %51 = arith.addf %49, %50 : vector<1x256xf32>
    %52 = arith.select %24, %47, %51 : vector<1x256xi1>, vector<1x256xf32>
    %53 = vector.extract_strided_slice %52 {offsets = [0, 64], sizes = [1, 64], strides = [1, 1]} : vector<1x256xf32> to vector<1x64xf32>
    %54 = arith.mulf %53, %40 : vector<1x64xf32>
    %55 = vector.extract_strided_slice %52 {offsets = [0, 0], sizes = [1, 64], strides = [1, 1]} : vector<1x256xf32> to vector<1x64xf32>
    %56 = vector.extract_strided_slice %52 {offsets = [0, 128], sizes = [1, 64], strides = [1, 1]} : vector<1x256xf32> to vector<1x64xf32>
    %57 = arith.mulf %55, %56 : vector<1x64xf32>
    %58 = arith.addf %54, %57 : vector<1x64xf32>
    %59 = vector.extract_strided_slice %52 {offsets = [0, 192], sizes = [1, 64], strides = [1, 1]} : vector<1x256xf32> to vector<1x64xf32>
    %60 = math.tanh %58 : vector<1x64xf32>
    %61 = arith.mulf %59, %60 : vector<1x64xf32>
    %62 = vector.extract_strided_slice %61 {offsets = [0, 0], sizes = [1, 32], strides = [1, 1]} : vector<1x64xf32> to vector<1x32xf32>
    %c0_22 = arith.constant 0 : index
    %c0_23 = arith.constant 0 : index
    %63 = vector.load %arg3[%c0_22, %c0_23] : memref<8x32xf32, #tpu.memory_space<vmem>>, vector<1x32xf32>
    tpu.vector_store %arg3[%c0_22, %c0_23], %62 {strides = array<i32>} : memref<8x32xf32, #tpu.memory_space<vmem>>, vector<1x32xf32>,
    %cst_24 = arith.constant dense<0.000000e+00> : vector<1x256xf32>
    %64 = tpu.matmul %61, %18, %cst_24 {dimension_numbers = #tpu.dot_dimension_numbers<[1], [0], [0], [1], [0, 0, 1, 1], [], []>} : vector<1x64xf32>, vector<64x256xf32>, vector<1x256xf32> -> vector<1x256xf32>
    %c2 = arith.constant 2 : index
    %c0_25 = arith.constant 0 : index
    %65 = vector.load %arg4[%c2, %c0_25] : memref<9x256xf32, #tpu.memory_space<vmem>>, vector<1x256xf32>
    %66 = arith.addf %64, %65 : vector<1x256xf32>
    %67 = math.tanh %66 : vector<1x256xf32>
    %cst_26 = arith.constant 5.000000e-01 : f32
    %68 = vector.broadcast %cst_26 : f32 to vector<1x256xf32>
    %69 = arith.mulf %68, %67 : vector<1x256xf32>
    %cst_27 = arith.constant 5.000000e-01 : f32
    %70 = vector.broadcast %cst_27 : f32 to vector<1x256xf32>
    %71 = arith.addf %69, %70 : vector<1x256xf32>
    %72 = arith.select %24, %67, %71 : vector<1x256xi1>, vector<1x256xf32>
    %73 = vector.extract_strided_slice %72 {offsets = [0, 64], sizes = [1, 64], strides = [1, 1]} : vector<1x256xf32> to vector<1x64xf32>
    %74 = arith.mulf %73, %58 : vector<1x64xf32>
    %75 = vector.extract_strided_slice %72 {offsets = [0, 0], sizes = [1, 64], strides = [1, 1]} : vector<1x256xf32> to vector<1x64xf32>
    %76 = vector.extract_strided_slice %72 {offsets = [0, 128], sizes = [1, 64], strides = [1, 1]} : vector<1x256xf32> to vector<1x64xf32>
    %77 = arith.mulf %75, %76 : vector<1x64xf32>
    %78 = arith.addf %74, %77 : vector<1x64xf32>
    %79 = vector.extract_strided_slice %72 {offsets = [0, 192], sizes = [1, 64], strides = [1, 1]} : vector<1x256xf32> to vector<1x64xf32>
    %80 = math.tanh %78 : vector<1x64xf32>
    %81 = arith.mulf %79, %80 : vector<1x64xf32>
    %82 = vector.extract_strided_slice %81 {offsets = [0, 0], sizes = [1, 32], strides = [1, 1]} : vector<1x64xf32> to vector<1x32xf32>
    %c1_28 = arith.constant 1 : index
    %c0_29 = arith.constant 0 : index
    %83 = vector.load %arg3[%c1_28, %c0_29] : memref<8x32xf32, #tpu.memory_space<vmem>>, vector<1x32xf32>
    tpu.vector_store %arg3[%c1_28, %c0_29], %82 {strides = array<i32>} : memref<8x32xf32, #tpu.memory_space<vmem>>, vector<1x32xf32>,
    %cst_30 = arith.constant dense<0.000000e+00> : vector<1x256xf32>
    %84 = tpu.matmul %81, %18, %cst_30 {dimension_numbers = #tpu.dot_dimension_numbers<[1], [0], [0], [1], [0, 0, 1, 1], [], []>} : vector<1x64xf32>, vector<64x256xf32>, vector<1x256xf32> -> vector<1x256xf32>
    %c3 = arith.constant 3 : index
    %c0_31 = arith.constant 0 : index
    %85 = vector.load %arg4[%c3, %c0_31] : memref<9x256xf32, #tpu.memory_space<vmem>>, vector<1x256xf32>
    %86 = arith.addf %84, %85 : vector<1x256xf32>
    %87 = math.tanh %86 : vector<1x256xf32>
    %cst_32 = arith.constant 5.000000e-01 : f32
    %88 = vector.broadcast %cst_32 : f32 to vector<1x256xf32>
    %89 = arith.mulf %88, %87 : vector<1x256xf32>
    %cst_33 = arith.constant 5.000000e-01 : f32
    %90 = vector.broadcast %cst_33 : f32 to vector<1x256xf32>
    %91 = arith.addf %89, %90 : vector<1x256xf32>
    %92 = arith.select %24, %87, %91 : vector<1x256xi1>, vector<1x256xf32>
    %93 = vector.extract_strided_slice %92 {offsets = [0, 64], sizes = [1, 64], strides = [1, 1]} : vector<1x256xf32> to vector<1x64xf32>
    %94 = arith.mulf %93, %78 : vector<1x64xf32>
    %95 = vector.extract_strided_slice %92 {offsets = [0, 0], sizes = [1, 64], strides = [1, 1]} : vector<1x256xf32> to vector<1x64xf32>
    %96 = vector.extract_strided_slice %92 {offsets = [0, 128], sizes = [1, 64], strides = [1, 1]} : vector<1x256xf32> to vector<1x64xf32>
    %97 = arith.mulf %95, %96 : vector<1x64xf32>
    %98 = arith.addf %94, %97 : vector<1x64xf32>
    %99 = vector.extract_strided_slice %92 {offsets = [0, 192], sizes = [1, 64], strides = [1, 1]} : vector<1x256xf32> to vector<1x64xf32>
    %100 = math.tanh %98 : vector<1x64xf32>
    %101 = arith.mulf %99, %100 : vector<1x64xf32>
    %102 = vector.extract_strided_slice %101 {offsets = [0, 0], sizes = [1, 32], strides = [1, 1]} : vector<1x64xf32> to vector<1x32xf32>
    %c2_34 = arith.constant 2 : index
    %c0_35 = arith.constant 0 : index
    %103 = vector.load %arg3[%c2_34, %c0_35] : memref<8x32xf32, #tpu.memory_space<vmem>>, vector<1x32xf32>
    tpu.vector_store %arg3[%c2_34, %c0_35], %102 {strides = array<i32>} : memref<8x32xf32, #tpu.memory_space<vmem>>, vector<1x32xf32>,
    %cst_36 = arith.constant dense<0.000000e+00> : vector<1x256xf32>
    %104 = tpu.matmul %101, %18, %cst_36 {dimension_numbers = #tpu.dot_dimension_numbers<[1], [0], [0], [1], [0, 0, 1, 1], [], []>} : vector<1x64xf32>, vector<64x256xf32>, vector<1x256xf32> -> vector<1x256xf32>
    %c4 = arith.constant 4 : index
    %c0_37 = arith.constant 0 : index
    %105 = vector.load %arg4[%c4, %c0_37] : memref<9x256xf32, #tpu.memory_space<vmem>>, vector<1x256xf32>
    %106 = arith.addf %104, %105 : vector<1x256xf32>
    %107 = math.tanh %106 : vector<1x256xf32>
    %cst_38 = arith.constant 5.000000e-01 : f32
    %108 = vector.broadcast %cst_38 : f32 to vector<1x256xf32>
    %109 = arith.mulf %108, %107 : vector<1x256xf32>
    %cst_39 = arith.constant 5.000000e-01 : f32
    %110 = vector.broadcast %cst_39 : f32 to vector<1x256xf32>
    %111 = arith.addf %109, %110 : vector<1x256xf32>
    %112 = arith.select %24, %107, %111 : vector<1x256xi1>, vector<1x256xf32>
    %113 = vector.extract_strided_slice %112 {offsets = [0, 64], sizes = [1, 64], strides = [1, 1]} : vector<1x256xf32> to vector<1x64xf32>
    %114 = arith.mulf %113, %98 : vector<1x64xf32>
    %115 = vector.extract_strided_slice %112 {offsets = [0, 0], sizes = [1, 64], strides = [1, 1]} : vector<1x256xf32> to vector<1x64xf32>
    %116 = vector.extract_strided_slice %112 {offsets = [0, 128], sizes = [1, 64], strides = [1, 1]} : vector<1x256xf32> to vector<1x64xf32>
    %117 = arith.mulf %115, %116 : vector<1x64xf32>
    %118 = arith.addf %114, %117 : vector<1x64xf32>
    %119 = vector.extract_strided_slice %112 {offsets = [0, 192], sizes = [1, 64], strides = [1, 1]} : vector<1x256xf32> to vector<1x64xf32>
    %120 = math.tanh %118 : vector<1x64xf32>
    %121 = arith.mulf %119, %120 : vector<1x64xf32>
    %122 = vector.extract_strided_slice %121 {offsets = [0, 0], sizes = [1, 32], strides = [1, 1]} : vector<1x64xf32> to vector<1x32xf32>
    %c3_40 = arith.constant 3 : index
    %c0_41 = arith.constant 0 : index
    %123 = vector.load %arg3[%c3_40, %c0_41] : memref<8x32xf32, #tpu.memory_space<vmem>>, vector<1x32xf32>
    tpu.vector_store %arg3[%c3_40, %c0_41], %122 {strides = array<i32>} : memref<8x32xf32, #tpu.memory_space<vmem>>, vector<1x32xf32>,
    %cst_42 = arith.constant dense<0.000000e+00> : vector<1x256xf32>
    %124 = tpu.matmul %121, %18, %cst_42 {dimension_numbers = #tpu.dot_dimension_numbers<[1], [0], [0], [1], [0, 0, 1, 1], [], []>} : vector<1x64xf32>, vector<64x256xf32>, vector<1x256xf32> -> vector<1x256xf32>
    %c5 = arith.constant 5 : index
    %c0_43 = arith.constant 0 : index
    %125 = vector.load %arg4[%c5, %c0_43] : memref<9x256xf32, #tpu.memory_space<vmem>>, vector<1x256xf32>
    %126 = arith.addf %124, %125 : vector<1x256xf32>
    %127 = math.tanh %126 : vector<1x256xf32>
    %cst_44 = arith.constant 5.000000e-01 : f32
    %128 = vector.broadcast %cst_44 : f32 to vector<1x256xf32>
    %129 = arith.mulf %128, %127 : vector<1x256xf32>
    %cst_45 = arith.constant 5.000000e-01 : f32
    %130 = vector.broadcast %cst_45 : f32 to vector<1x256xf32>
    %131 = arith.addf %129, %130 : vector<1x256xf32>
    %132 = arith.select %24, %127, %131 : vector<1x256xi1>, vector<1x256xf32>
    %133 = vector.extract_strided_slice %132 {offsets = [0, 64], sizes = [1, 64], strides = [1, 1]} : vector<1x256xf32> to vector<1x64xf32>
    %134 = arith.mulf %133, %118 : vector<1x64xf32>
    %135 = vector.extract_strided_slice %132 {offsets = [0, 0], sizes = [1, 64], strides = [1, 1]} : vector<1x256xf32> to vector<1x64xf32>
    %136 = vector.extract_strided_slice %132 {offsets = [0, 128], sizes = [1, 64], strides = [1, 1]} : vector<1x256xf32> to vector<1x64xf32>
    %137 = arith.mulf %135, %136 : vector<1x64xf32>
    %138 = arith.addf %134, %137 : vector<1x64xf32>
    %139 = vector.extract_strided_slice %132 {offsets = [0, 192], sizes = [1, 64], strides = [1, 1]} : vector<1x256xf32> to vector<1x64xf32>
    %140 = math.tanh %138 : vector<1x64xf32>
    %141 = arith.mulf %139, %140 : vector<1x64xf32>
    %142 = vector.extract_strided_slice %141 {offsets = [0, 0], sizes = [1, 32], strides = [1, 1]} : vector<1x64xf32> to vector<1x32xf32>
    %c4_46 = arith.constant 4 : index
    %c0_47 = arith.constant 0 : index
    %143 = vector.load %arg3[%c4_46, %c0_47] : memref<8x32xf32, #tpu.memory_space<vmem>>, vector<1x32xf32>
    tpu.vector_store %arg3[%c4_46, %c0_47], %142 {strides = array<i32>} : memref<8x32xf32, #tpu.memory_space<vmem>>, vector<1x32xf32>,
    %cst_48 = arith.constant dense<0.000000e+00> : vector<1x256xf32>
    %144 = tpu.matmul %141, %18, %cst_48 {dimension_numbers = #tpu.dot_dimension_numbers<[1], [0], [0], [1], [0, 0, 1, 1], [], []>} : vector<1x64xf32>, vector<64x256xf32>, vector<1x256xf32> -> vector<1x256xf32>
    %c6 = arith.constant 6 : index
    %c0_49 = arith.constant 0 : index
    %145 = vector.load %arg4[%c6, %c0_49] : memref<9x256xf32, #tpu.memory_space<vmem>>, vector<1x256xf32>
    %146 = arith.addf %144, %145 : vector<1x256xf32>
    %147 = math.tanh %146 : vector<1x256xf32>
    %cst_50 = arith.constant 5.000000e-01 : f32
    %148 = vector.broadcast %cst_50 : f32 to vector<1x256xf32>
    %149 = arith.mulf %148, %147 : vector<1x256xf32>
    %cst_51 = arith.constant 5.000000e-01 : f32
    %150 = vector.broadcast %cst_51 : f32 to vector<1x256xf32>
    %151 = arith.addf %149, %150 : vector<1x256xf32>
    %152 = arith.select %24, %147, %151 : vector<1x256xi1>, vector<1x256xf32>
    %153 = vector.extract_strided_slice %152 {offsets = [0, 64], sizes = [1, 64], strides = [1, 1]} : vector<1x256xf32> to vector<1x64xf32>
    %154 = arith.mulf %153, %138 : vector<1x64xf32>
    %155 = vector.extract_strided_slice %152 {offsets = [0, 0], sizes = [1, 64], strides = [1, 1]} : vector<1x256xf32> to vector<1x64xf32>
    %156 = vector.extract_strided_slice %152 {offsets = [0, 128], sizes = [1, 64], strides = [1, 1]} : vector<1x256xf32> to vector<1x64xf32>
    %157 = arith.mulf %155, %156 : vector<1x64xf32>
    %158 = arith.addf %154, %157 : vector<1x64xf32>
    %159 = vector.extract_strided_slice %152 {offsets = [0, 192], sizes = [1, 64], strides = [1, 1]} : vector<1x256xf32> to vector<1x64xf32>
    %160 = math.tanh %158 : vector<1x64xf32>
    %161 = arith.mulf %159, %160 : vector<1x64xf32>
    %162 = vector.extract_strided_slice %161 {offsets = [0, 0], sizes = [1, 32], strides = [1, 1]} : vector<1x64xf32> to vector<1x32xf32>
    %c5_52 = arith.constant 5 : index
    %c0_53 = arith.constant 0 : index
    %163 = vector.load %arg3[%c5_52, %c0_53] : memref<8x32xf32, #tpu.memory_space<vmem>>, vector<1x32xf32>
    tpu.vector_store %arg3[%c5_52, %c0_53], %162 {strides = array<i32>} : memref<8x32xf32, #tpu.memory_space<vmem>>, vector<1x32xf32>,
    %cst_54 = arith.constant dense<0.000000e+00> : vector<1x256xf32>
    %164 = tpu.matmul %161, %18, %cst_54 {dimension_numbers = #tpu.dot_dimension_numbers<[1], [0], [0], [1], [0, 0, 1, 1], [], []>} : vector<1x64xf32>, vector<64x256xf32>, vector<1x256xf32> -> vector<1x256xf32>
    %c7 = arith.constant 7 : index
    %c0_55 = arith.constant 0 : index
    %165 = vector.load %arg4[%c7, %c0_55] : memref<9x256xf32, #tpu.memory_space<vmem>>, vector<1x256xf32>
    %166 = arith.addf %164, %165 : vector<1x256xf32>
    %167 = math.tanh %166 : vector<1x256xf32>
    %cst_56 = arith.constant 5.000000e-01 : f32
    %168 = vector.broadcast %cst_56 : f32 to vector<1x256xf32>
    %169 = arith.mulf %168, %167 : vector<1x256xf32>
    %cst_57 = arith.constant 5.000000e-01 : f32
    %170 = vector.broadcast %cst_57 : f32 to vector<1x256xf32>
    %171 = arith.addf %169, %170 : vector<1x256xf32>
    %172 = arith.select %24, %167, %171 : vector<1x256xi1>, vector<1x256xf32>
    %173 = vector.extract_strided_slice %172 {offsets = [0, 64], sizes = [1, 64], strides = [1, 1]} : vector<1x256xf32> to vector<1x64xf32>
    %174 = arith.mulf %173, %158 : vector<1x64xf32>
    %175 = vector.extract_strided_slice %172 {offsets = [0, 0], sizes = [1, 64], strides = [1, 1]} : vector<1x256xf32> to vector<1x64xf32>
    %176 = vector.extract_strided_slice %172 {offsets = [0, 128], sizes = [1, 64], strides = [1, 1]} : vector<1x256xf32> to vector<1x64xf32>
    %177 = arith.mulf %175, %176 : vector<1x64xf32>
    %178 = arith.addf %174, %177 : vector<1x64xf32>
    %179 = vector.extract_strided_slice %172 {offsets = [0, 192], sizes = [1, 64], strides = [1, 1]} : vector<1x256xf32> to vector<1x64xf32>
    %180 = math.tanh %178 : vector<1x64xf32>
    %181 = arith.mulf %179, %180 : vector<1x64xf32>
    %182 = vector.extract_strided_slice %181 {offsets = [0, 0], sizes = [1, 32], strides = [1, 1]} : vector<1x64xf32> to vector<1x32xf32>
    %c6_58 = arith.constant 6 : index
    %c0_59 = arith.constant 0 : index
    %183 = vector.load %arg3[%c6_58, %c0_59] : memref<8x32xf32, #tpu.memory_space<vmem>>, vector<1x32xf32>
    tpu.vector_store %arg3[%c6_58, %c0_59], %182 {strides = array<i32>} : memref<8x32xf32, #tpu.memory_space<vmem>>, vector<1x32xf32>,
    %cst_60 = arith.constant dense<0.000000e+00> : vector<1x256xf32>
    %184 = tpu.matmul %181, %18, %cst_60 {dimension_numbers = #tpu.dot_dimension_numbers<[1], [0], [0], [1], [0, 0, 1, 1], [], []>} : vector<1x64xf32>, vector<64x256xf32>, vector<1x256xf32> -> vector<1x256xf32>
    %c8_61 = arith.constant 8 : index
    %c0_62 = arith.constant 0 : index
    %185 = vector.load %arg4[%c8_61, %c0_62] : memref<9x256xf32, #tpu.memory_space<vmem>>, vector<1x256xf32>
    %186 = arith.addf %184, %185 : vector<1x256xf32>
    %187 = math.tanh %186 : vector<1x256xf32>
    %cst_63 = arith.constant 5.000000e-01 : f32
    %188 = vector.broadcast %cst_63 : f32 to vector<1x256xf32>
    %189 = arith.mulf %188, %187 : vector<1x256xf32>
    %cst_64 = arith.constant 5.000000e-01 : f32
    %190 = vector.broadcast %cst_64 : f32 to vector<1x256xf32>
    %191 = arith.addf %189, %190 : vector<1x256xf32>
    %192 = arith.select %24, %187, %191 : vector<1x256xi1>, vector<1x256xf32>
    %193 = vector.extract_strided_slice %192 {offsets = [0, 64], sizes = [1, 64], strides = [1, 1]} : vector<1x256xf32> to vector<1x64xf32>
    %194 = arith.mulf %193, %178 : vector<1x64xf32>
    %195 = vector.extract_strided_slice %192 {offsets = [0, 0], sizes = [1, 64], strides = [1, 1]} : vector<1x256xf32> to vector<1x64xf32>
    %196 = vector.extract_strided_slice %192 {offsets = [0, 128], sizes = [1, 64], strides = [1, 1]} : vector<1x256xf32> to vector<1x64xf32>
    %197 = arith.mulf %195, %196 : vector<1x64xf32>
    %198 = arith.addf %194, %197 : vector<1x64xf32>
    %199 = vector.extract_strided_slice %192 {offsets = [0, 192], sizes = [1, 64], strides = [1, 1]} : vector<1x256xf32> to vector<1x64xf32>
    %200 = math.tanh %198 : vector<1x64xf32>
    %201 = arith.mulf %199, %200 : vector<1x64xf32>
    %202 = vector.extract_strided_slice %201 {offsets = [0, 0], sizes = [1, 32], strides = [1, 1]} : vector<1x64xf32> to vector<1x32xf32>
    %c7_65 = arith.constant 7 : index
    %c0_66 = arith.constant 0 : index
    %203 = vector.load %arg3[%c7_65, %c0_66] : memref<8x32xf32, #tpu.memory_space<vmem>>, vector<1x32xf32>
    tpu.vector_store %arg3[%c7_65, %c0_66], %202 {strides = array<i32>} : memref<8x32xf32, #tpu.memory_space<vmem>>, vector<1x32xf32>,
    return
  }
}

</mosaic_0001>

<llo_original>
// kernel: tpu_custom_call.1
$region0: #{tpu_custom_call.1}
  #allocation0 [shape = 'u32[]', space=smem, size = 0x4, offset = 0x4, fixed_abs, tag = 'smem constant byte address 0x4 - core index']
  #allocation1 [shape = 'u32[144,128]{1,0:T(1,128)}', space=vmem, size = 0x12000, scoped, tag = 'internal scratch']
  #allocation2 [shape = 'f32[9,256]{1,0:T(8,128)}', space=vmem, size = 0x4000, scoped, tag = 'scratch operand']
  %s0 = inlined_call_operand.hbm [shape: f32[8,16], index: 0, kind: input, shape index: {}]
  %s1 = inlined_call_operand.hbm [shape: f32[17,32], index: 1, kind: input, shape index: {}]
  %s2 = inlined_call_operand.hbm [shape: f32[97,256], index: 2, kind: input, shape index: {}]
  %s3 = inlined_call_operand.hbm [shape: f32[8,32], index: 3, kind: output, shape index: {}]
  %s4 = sld [smem:[#allocation0]]
  $region34: #{tpu_custom_call.1} parent=0
    _
  %s6 = ssub.s32 1, %s4
  %s7 = scalar_select 0, %s6, %s4
  $region1: #{tpu_custom_call.1} parent=0
    #allocation3 [shape = 'u8[4096]{0}', space=vmem, size = 0x1000, scoped, tag = 'input window, operand 0, single buffered']
    #allocation4 [shape = 's32[1]{0}', space=sflag, size = 0x4, scoped, tag = 'scoped memory for tpu_custom_call.1']
    #allocation5 [shape = 's32[1]{0}', space=sflag, size = 0x4, scoped, tag = 'scoped memory for tpu_custom_call.1']
    #allocation6 [shape = 'u8[12288]{0}', space=vmem, size = 0x3000, scoped, tag = 'input window, operand 1, single buffered']
    #allocation7 [shape = 's32[1]{0}', space=sflag, size = 0x4, scoped, tag = 'scoped memory for tpu_custom_call.1']
    #allocation8 [shape = 'u8[106496]{0}', space=vmem, size = 0x1a000, scoped, tag = 'input window, operand 2, single buffered']
    #allocation9 [shape = 'u8[4096]{0}', space=vmem, size = 0x1000, scoped, tag = 'output window, operand 0, single buffered']
    %8 = vsyncpa [#allocation4], 0
    %9 = vsyncpa [#allocation7], 0
    %10 = vsyncpa [#allocation5], 0
    // Predicated region
    $region2: #{tpu_custom_call.1} parent=1 // pred_check
      _
    $region3: #{tpu_custom_call.1} parent=1 // pred_check_branch
      %12 = sbr.rel (0) target = $region5
    $region4: #{tpu_custom_call.1} parent=1 // pred_region
      %s14 = ssub.s32 128, 128
      %15 = vsyncadd [#allocation4], %s14
      %s17 = sshll.u32 [#allocation3], 4
      %s18 = int_to_ptr.vmem [resolvable:$true] %s17
      %20 = dma.hbm_to_vmem [thread:$0]  %s0, 128, %s18, [#allocation4]
    $region5: #{tpu_custom_call.1} parent=1 // pred_fallthru
      _
    // Predicated region
    $region6: #{tpu_custom_call.1} parent=1 // pred_check
      _
    $region7: #{tpu_custom_call.1} parent=1 // pred_check_branch
      %22 = sbr.rel (0) target = $region9
    $region8: #{tpu_custom_call.1} parent=1 // pred_region
      %s24 = ssub.s32 384, 384
      %25 = vsyncadd [#allocation7], %s24
      %s26 = sshll.u32 [#allocation6], 4
      %s27 = int_to_ptr.vmem [resolvable:$true] %s26
      %32 = dma.hbm_to_vmem [thread:$0]  %s1, 384, %s27, [#allocation7], 128, 128, 8
    $region9: #{tpu_custom_call.1} parent=1 // pred_fallthru
      _
    // Predicated region
    $region10: #{tpu_custom_call.1} parent=1 // pred_check
      _
    $region11: #{tpu_custom_call.1} parent=1 // pred_check_branch
      %34 = sbr.rel (0) target = $region13
    $region12: #{tpu_custom_call.1} parent=1 // pred_region
      %s36 = ssub.s32 3328, 3328
      %37 = vsyncadd [#allocation7], %s36
      %s38 = sshll.u32 [#allocation8], 4
      %s39 = int_to_ptr.vmem [resolvable:$true] %s38
      %44 = dma.hbm_to_vmem [thread:$0]  %s2, 3328, %s39, [#allocation7], 256, 256, 16
    $region13: #{tpu_custom_call.1} parent=1 // pred_fallthru
      _
    // Predicated region
    $region14: #{tpu_custom_call.1} parent=1 // pred_check
      _
    $region15: #{tpu_custom_call.1} parent=1 // pred_check_branch
      %46 = sbr.rel (0) target = $region17
    $region16: #{tpu_custom_call.1} parent=1 // pred_region
      %47 = dma.done [#allocation4], 128
    $region17: #{tpu_custom_call.1} parent=1 // pred_fallthru
      _
    // Predicated region
    $region18: #{tpu_custom_call.1} parent=1 // pred_check
      _
    $region19: #{tpu_custom_call.1} parent=1 // pred_check_branch
      %49 = sbr.rel (0) target = $region21
    $region20: #{tpu_custom_call.1} parent=1 // pred_region
      %50 = dma.done [#allocation7], 384
    $region21: #{tpu_custom_call.1} parent=1 // pred_fallthru
      _
    // Predicated region
    $region22: #{tpu_custom_call.1} parent=1 // pred_check
      _
    $region23: #{tpu_custom_call.1} parent=1 // pred_check_branch
      %52 = sbr.rel (0) target = $region25
    $region24: #{tpu_custom_call.1} parent=1 // pred_region
      %53 = dma.done [#allocation7], 3328
    $region25: #{tpu_custom_call.1} parent=1 // pred_fallthru
      _
    %v54 = vld [vmem:[#allocation3] sm:$0xff]
    %v55 = vld [vmem:[#allocation6] sm:$0xff]
    %v56 = vld [vmem:[#allocation6 + $0x8] sm:$0xff]
    %v57 = vld [vmem:[#allocation6 + $0x10] sm:$0x1]
    %v58 = vlaneseq
    %v59 = vshrl.u32 %v58, 7
    %v60 = vsub.s32 0, %v59
    %v61 = vrot.slane %v57, %v60
    %vm62 = vcmask 130048
    %v64 = vsel %vm62, %v54, 0
    %66 = vmatprep.subr.mxu0 0.0
    %67 = vmatpush1.msra.mxu0 0.0
    %68 = vmatprep.subr.mxu0 0.0
    %69 = vmatpush1.msra.mxu0 0.0
    %70 = vmatprep.subr.mxu0 0.0
    %71 = vmatpush1.msra.mxu0 0.0
    %72 = vmatprep.subr.mxu0 0.0
    %73 = vmatpush1.msra.mxu0 0.0
    %74 = vmatprep.subr.mxu0 0.0
    %75 = vmatpush1.msra.mxu0 0.0
    %76 = vmatprep.subr.mxu0 0.0
    %77 = vmatpush1.msra.mxu0 0.0
    %78 = vmatprep.subr.mxu0 0.0
    %79 = vmatpush1.msra.mxu0 0.0
    %80 = vmatprep.subr.mxu0 0.0
    %81 = vmatpush1.msra.mxu0 0.0
    %82 = vmatprep.subr.mxu0 0.0
    %83 = vmatpush1.msra.mxu0 0.0
    %84 = vmatprep.subr.mxu0 0.0
    %85 = vmatpush1.msra.mxu0 0.0
    %86 = vmatprep.subr.mxu0 0.0
    %87 = vmatpush1.msra.mxu0 0.0
    %88 = vmatprep.subr.mxu0 0.0
    %89 = vmatpush1.msra.mxu0 0.0
    %90 = vmatprep.subr.mxu0 0.0
    %91 = vmatpush1.msra.mxu0 0.0
    %92 = vmatprep.subr.mxu0 0.0
    %93 = vmatpush1.msra.mxu0 0.0
    %94 = vmatprep.subr.mxu0 0.0
    %95 = vmatpush1.msra.mxu0 %v56
    %96 = vmatprep.subr.mxu0 0.0
    %97 = vmatpush1.msra.mxu0 %v55
    %98 = vmatprep.subr.mxu0 0.0
    %99 = vmatpush2.msra.mxu0 0.0
    %100 = vmatprep.subr.mxu0 0.0
    %101 = vmatpush2.msra.mxu0 0.0
    %102 = vmatprep.subr.mxu0 0.0
    %103 = vmatpush2.msra.mxu0 0.0
    %104 = vmatprep.subr.mxu0 0.0
    %105 = vmatpush2.msra.mxu0 0.0
    %106 = vmatprep.subr.mxu0 0.0
    %107 = vmatpush2.msra.mxu0 0.0
    %108 = vmatprep.subr.mxu0 0.0
    %109 = vmatpush2.msra.mxu0 0.0
    %110 = vmatprep.subr.mxu0 0.0
    %111 = vmatpush2.msra.mxu0 0.0
    %112 = vmatprep.subr.mxu0 0.0
    %113 = vmatpush2.msra.mxu0 0.0
    %114 = vmatprep.subr.mxu0 0.0
    %115 = vmatpush2.msra.mxu0 0.0
    %116 = vmatprep.subr.mxu0 0.0
    %117 = vmatpush2.msra.mxu0 0.0
    %118 = vmatprep.subr.mxu0 0.0
    %119 = vmatpush2.msra.mxu0 0.0
    %120 = vmatprep.subr.mxu0 0.0
    %121 = vmatpush2.msra.mxu0 0.0
    %122 = vmatprep.subr.mxu0 0.0
    %123 = vmatpush2.msra.mxu0 0.0
    %124 = vmatprep.subr.mxu0 0.0
    %125 = vmatpush2.msra.mxu0 0.0
    %126 = vmatprep.subr.mxu0 0.0
    %127 = vmatpush2.msra.mxu0 0.0
    %128 = vmatprep.subr.mxu0 0.0
    %129 = vmatpush2.msra.mxu0 0.0
    %130 = vmatprep.mubr.f32.mxu0 0.0
    %131 = vmatmul.mubr.f32.gmra.mxu0 %v64
    %v132 = vpop.f32.mrf.mxu0
    %v133 = vadd.f32 %v61, %v132
    %v134 = vpop.f32.mrf.mxu0
    %135 = vdwg.mxu0
    %vm136 = vcmp.ge.f32.partialorder %v133, 0.0
    %v137 = vmul.f32 %v133, 0.01
    %v138 = vsel %vm136, %v133, %v137
    %v139 = vld [vmem:[#allocation8 + $0x80] sm:$0xff]
    %v140 = vld [vmem:[#allocation8 + $0x88] sm:$0xff]
    %v141 = vld [vmem:[#allocation8 + $0x90] sm:$0xff]
    %v142 = vld [vmem:[#allocation8 + $0x98] sm:$0xff]
    %v143 = vld [vmem:[#allocation8 + $0xa0] sm:$0xff]
    %v144 = vld [vmem:[#allocation8 + $0xa8] sm:$0xff]
    %v145 = vld [vmem:[#allocation8 + $0xb0] sm:$0xff]
    %v146 = vld [vmem:[#allocation8 + $0xb8] sm:$0xff]
    %s147 = scalar_lea.vmem [#allocation8], 192
    %v148 = vld [vmem:[%s147] ss:$8 sm:$0x3]
    %v150 = vlaneseq
    %v151 = vshrl.u32 %v150, 7
    %v152 = vsub.s32 0, %v151
    %v153 = vrot.slane %v148, %v152
    %v154 = vlaneseq
    %v155 = vshrl.u32 %v154, 7
    %v156 = vsub.s32 1, %v155
    %v157 = vrot.slane %v148, %v156
    %vm160 = vcmask 261120
    %v162 = vsel %vm160, %v138, 0
    %164 = vmatprep.subr.mxu0 0.0
    %165 = vmatpush1.msra.mxu0 0.0
    %166 = vmatprep.subr.mxu0 0.0
    %167 = vmatpush1.msra.mxu0 0.0
    %168 = vmatprep.subr.mxu0 0.0
    %169 = vmatpush1.msra.mxu0 0.0
    %170 = vmatprep.subr.mxu0 0.0
    %171 = vmatpush1.msra.mxu0 0.0
    %172 = vmatprep.subr.mxu0 0.0
    %173 = vmatpush1.msra.mxu0 0.0
    %174 = vmatprep.subr.mxu0 0.0
    %175 = vmatpush1.msra.mxu0 0.0
    %176 = vmatprep.subr.mxu0 0.0
    %177 = vmatpush1.msra.mxu0 0.0
    %178 = vmatprep.subr.mxu0 0.0
    %179 = vmatpush1.msra.mxu0 0.0
    %180 = vmatprep.subr.mxu0 0.0
    %181 = vmatpush1.msra.mxu0 0.0
    %182 = vmatprep.subr.mxu0 0.0
    %183 = vmatpush1.msra.mxu0 0.0
    %184 = vmatprep.subr.mxu0 0.0
    %185 = vmatpush1.msra.mxu0 0.0
    %186 = vmatprep.subr.mxu0 0.0
    %187 = vmatpush1.msra.mxu0 0.0
    %188 = vmatprep.subr.mxu0 %v146
    %189 = vmatpush1.msra.mxu0 %v145
    %190 = vmatprep.subr.mxu0 %v144
    %191 = vmatpush1.msra.mxu0 %v143
    %192 = vmatprep.subr.mxu0 %v142
    %193 = vmatpush1.msra.mxu0 %v141
    %194 = vmatprep.subr.mxu0 %v140
    %195 = vmatpush1.msra.mxu0 %v139
    %196 = vmatprep.subr.mxu0 0.0
    %197 = vmatpush2.msra.mxu0 0.0
    %198 = vmatprep.subr.mxu0 0.0
    %199 = vmatpush2.msra.mxu0 0.0
    %200 = vmatprep.subr.mxu0 0.0
    %201 = vmatpush2.msra.mxu0 0.0
    %202 = vmatprep.subr.mxu0 0.0
    %203 = vmatpush2.msra.mxu0 0.0
    %204 = vmatprep.subr.mxu0 0.0
    %205 = vmatpush2.msra.mxu0 0.0
    %206 = vmatprep.subr.mxu0 0.0
    %207 = vmatpush2.msra.mxu0 0.0
    %208 = vmatprep.subr.mxu0 0.0
    %209 = vmatpush2.msra.mxu0 0.0
    %210 = vmatprep.subr.mxu0 0.0
    %211 = vmatpush2.msra.mxu0 0.0
    %212 = vmatprep.subr.mxu0 0.0
    %213 = vmatpush2.msra.mxu0 0.0
    %214 = vmatprep.subr.mxu0 0.0
    %215 = vmatpush2.msra.mxu0 0.0
    %216 = vmatprep.subr.mxu0 0.0
    %217 = vmatpush2.msra.mxu0 0.0
    %218 = vmatprep.subr.mxu0 0.0
    %219 = vmatpush2.msra.mxu0 0.0
    %220 = vmatprep.subr.mxu0 0.0
    %221 = vmatpush2.msra.mxu0 0.0
    %222 = vmatprep.subr.mxu0 0.0
    %223 = vmatpush2.msra.mxu0 0.0
    %224 = vmatprep.subr.mxu0 0.0
    %225 = vmatpush2.msra.mxu0 0.0
    %226 = vmatprep.subr.mxu0 0.0
    %227 = vmatpush2.msra.mxu0 0.0
    %228 = vmatprep.mubr.f32.mxu0 0.0
    %229 = vmatmul.mubr.f32.gmra.mxu0 %v162
    %v230 = vpop.f32.mrf.mxu0
    %v231 = vadd.f32 %v153, %v230
    %v232 = vpop.f32.mrf.mxu0
    %v233 = vadd.f32 %v157, %v232
    %234 = vdwg.mxu0
    %235 = vst [vmem:[#allocation2] sm:$0xff] %v231
    %236 = vst [vmem:[#allocation2 + $0x8] sm:$0xff] %v233
    %v237 = vlaneseq
    %vm238 = vcmp.ge.s32.totalorder %v237, 0
    %vm239 = vcmp.lt.s32.totalorder %v237, 256
    %vm240 = vmand %vm238, %vm239
    %s241 = scalar_lea.vmem [#allocation2], 16
    %242 = vst.msk [vmem:[%s241] ss:$8 sm:$0x3] %vm240, %v148
    %243 = vst.msk [vmem:[%s241] ss:$8 sm:$0x0] %vm240, %v148
    %v244 = vld [vmem:[#allocation8] sm:$0xff]
    %v245 = vld [vmem:[#allocation8 + $0x8] sm:$0xff]
    %v246 = vld [vmem:[#allocation8 + $0x10] sm:$0xff]
    %v247 = vld [vmem:[#allocation8 + $0x18] sm:$0xff]
    %v248 = vld [vmem:[#allocation8 + $0x20] sm:$0xff]
    %v249 = vld [vmem:[#allocation8 + $0x28] sm:$0xff]
    %v250 = vld [vmem:[#allocation8 + $0x30] sm:$0xff]
    %v251 = vld [vmem:[#allocation8 + $0x38] sm:$0xff]
    %v252 = vld [vmem:[#allocation8 + $0x40] sm:$0xff]
    %v253 = vld [vmem:[#allocation8 + $0x48] sm:$0xff]
    %v254 = vld [vmem:[#allocation8 + $0x50] sm:$0xff]
    %v255 = vld [vmem:[#allocation8 + $0x58] sm:$0xff]
    %v256 = vld [vmem:[#allocation8 + $0x60] sm:$0xff]
    %v257 = vld [vmem:[#allocation8 + $0x68] sm:$0xff]
    %v258 = vld [vmem:[#allocation8 + $0x70] sm:$0xff]
    %v259 = vld [vmem:[#allocation8 + $0x78] sm:$0xff]
    %v260 = vlaneseq
    %v261 = vand.u32 %v260, 127
    %v262 = vadd.s32 %v261, 128
    %vm263 = vcmp.ge.s32.totalorder %v261, 128
    %vm264 = vcmp.ge.s32.totalorder %v262, 128
    %vm265 = vcmp.lt.s32.totalorder %v261, 192
    %vm266 = vcmp.lt.s32.totalorder %v262, 192
    %vm267 = vmand %vm263, %vm265
    %vm268 = vmand %vm264, %vm266
    %vm269 = vcmp.ge.s32.totalorder %v261, 32
    %v270 = vsel %vm269, 1, 0
    %v271 = vcvt.s32.f32 %v270
    %v272 = vld [vmem:[#allocation2] ss:$8 sm:$0x3]
    %v273 = vtanh.pop %v272
    %v274 = vmul.f32 %v273, 0.5
    %v275 = vadd.f32 %v274, 0.5
    %v277 = vlaneseq
    %v278 = vshrl.u32 %v277, 7
    %v279 = vsub.s32 0, %v278
    %v280 = vrot.slane %v273, %v279
    %v281 = vlaneseq
    %v282 = vshrl.u32 %v281, 7
    %v283 = vsub.s32 1, %v282
    %v284 = vrot.slane %v273, %v283
    %v288 = vlaneseq
    %v289 = vshrl.u32 %v288, 7
    %v290 = vsub.s32 0, %v289
    %v291 = vrot.slane %v275, %v290
    %v292 = vlaneseq
    %v293 = vshrl.u32 %v292, 7
    %v294 = vsub.s32 1, %v293
    %v295 = vrot.slane %v275, %v294
    %v298 = vsel %vm267, %v280, %v291
    %v299 = vsel %vm268, %v284, %v295
    %v300 = vmul.f32 %v298, %v299
    %v301 = vmul.f32 %v300, %v271
    %v302 = vtanh.pop %v301
    %304 = vrot.lane.b32.xlu0 %v302, 64
    %v305 = vpop.permute.xlu0 %304
    %v307 = vmul.f32 %v299, %v305
    %s308 = scalar_lea.vmem [#allocation2], 1
    %v309 = vld [vmem:[%s308] ss:$8 sm:$0x3]
    %311 = vrot.lane.b32.xlu0 %v307, 64
    %v312 = vpop.permute.xlu0 %311
    %v314 = vlaneseq
    %v315 = vshrl.u32 %v314, 7
    %v316 = vsub.s32 0, %v315
    %v317 = vrot.slane %v309, %v316
    %v318 = vlaneseq
    %v319 = vshrl.u32 %v318, 7
    %v320 = vsub.s32 1, %v319
    %v321 = vrot.slane %v309, %v320
    %vm324 = vcmask 523264
    %v325 = vsel %vm324, %v312, 0
    %327 = vmatprep.subr.mxu0 0.0
    %328 = vmatpush1.msra.mxu0 0.0
    %329 = vmatprep.subr.mxu0 0.0
    %330 = vmatpush1.msra.mxu0 0.0
    %331 = vmatprep.subr.mxu0 0.0
    %332 = vmatpush1.msra.mxu0 0.0
    %333 = vmatprep.subr.mxu0 0.0
    %334 = vmatpush1.msra.mxu0 0.0
    %335 = vmatprep.subr.mxu0 0.0
    %336 = vmatpush1.msra.mxu0 0.0
    %337 = vmatprep.subr.mxu0 0.0
    %338 = vmatpush1.msra.mxu0 0.0
    %339 = vmatprep.subr.mxu0 0.0
    %340 = vmatpush1.msra.mxu0 0.0
    %341 = vmatprep.subr.mxu0 0.0
    %342 = vmatpush1.msra.mxu0 0.0
    %343 = vmatprep.subr.mxu0 %v259
    %344 = vmatpush1.msra.mxu0 %v258
    %345 = vmatprep.subr.mxu0 %v257
    %346 = vmatpush1.msra.mxu0 %v256
    %347 = vmatprep.subr.mxu0 %v255
    %348 = vmatpush1.msra.mxu0 %v254
    %349 = vmatprep.subr.mxu0 %v253
    %350 = vmatpush1.msra.mxu0 %v252
    %351 = vmatprep.subr.mxu0 %v251
    %352 = vmatpush1.msra.mxu0 %v250
    %353 = vmatprep.subr.mxu0 %v249
    %354 = vmatpush1.msra.mxu0 %v248
    %355 = vmatprep.subr.mxu0 %v247
    %356 = vmatpush1.msra.mxu0 %v246
    %357 = vmatprep.subr.mxu0 %v245
    %358 = vmatpush1.msra.mxu0 %v244
    %359 = vmatprep.subr.mxu0 0.0
    %360 = vmatpush2.msra.mxu0 0.0
    %361 = vmatprep.subr.mxu0 0.0
    %362 = vmatpush2.msra.mxu0 0.0
    %363 = vmatprep.subr.mxu0 0.0
    %364 = vmatpush2.msra.mxu0 0.0
    %365 = vmatprep.subr.mxu0 0.0
    %366 = vmatpush2.msra.mxu0 0.0
    %367 = vmatprep.subr.mxu0 0.0
    %368 = vmatpush2.msra.mxu0 0.0
    %369 = vmatprep.subr.mxu0 0.0
    %370 = vmatpush2.msra.mxu0 0.0
    %371 = vmatprep.subr.mxu0 0.0
    %372 = vmatpush2.msra.mxu0 0.0
    %373 = vmatprep.subr.mxu0 0.0
    %374 = vmatpush2.msra.mxu0 0.0
    %375 = vmatprep.subr.mxu0 0.0
    %376 = vmatpush2.msra.mxu0 0.0
    %377 = vmatprep.subr.mxu0 0.0
    %378 = vmatpush2.msra.mxu0 0.0
    %379 = vmatprep.subr.mxu0 0.0
    %380 = vmatpush2.msra.mxu0 0.0
    %381 = vmatprep.subr.mxu0 0.0
    %382 = vmatpush2.msra.mxu0 0.0
    %383 = vmatprep.subr.mxu0 0.0
    %384 = vmatpush2.msra.mxu0 0.0
    %385 = vmatprep.subr.mxu0 0.0
    %386 = vmatpush2.msra.mxu0 0.0
    %387 = vmatprep.subr.mxu0 0.0
    %388 = vmatpush2.msra.mxu0 0.0
    %389 = vmatprep.subr.mxu0 0.0
    %390 = vmatpush2.msra.mxu0 0.0
    %391 = vmatprep.mubr.f32.mxu0 0.0
    %392 = vmatmul.mubr.f32.gmra.mxu0 %v325
    %v393 = vpop.f32.mrf.mxu0
    %v394 = vadd.f32 %v317, %v393
    %v395 = vpop.f32.mrf.mxu0
    %v396 = vadd.f32 %v321, %v395
    %397 = vdwg.mxu0
    %v398 = vtanh.pop %v394
    %v399 = vtanh.pop %v396
    %v400 = vmul.f32 %v398, 0.5
    %v401 = vmul.f32 %v399, 0.5
    %v402 = vadd.f32 %v400, 0.5
    %v403 = vadd.f32 %v401, 0.5
    %v404 = vsel %vm267, %v398, %v402
    %v405 = vsel %vm268, %v399, %v403
    %407 = vrot.lane.b32.xlu0 %v301, 64
    %v408 = vpop.permute.xlu0 %407
    %v410 = vmul.f32 %v404, %v408
    %v411 = vmul.f32 %v404, %v405
    %413 = vrot.lane.b32.xlu0 %v411, 64
    %v414 = vpop.permute.xlu0 %413
    %v416 = vadd.f32 %v410, %v414
    %v417 = vtanh.pop %v416
    %v418 = vmul.f32 %v405, %v417
    %420 = vrot.lane.b32.xlu0 %v418, 64
    %v421 = vpop.permute.xlu0 %420
    %vm423 = vcmask 253952
    %424 = vst.msk [vmem:[#allocation9] sm:$0x1] %vm423, %v421
    %s425 = scalar_lea.vmem [#allocation2], 2
    %v426 = vld [vmem:[%s425] ss:$8 sm:$0x3]
    %v428 = vlaneseq
    %v429 = vshrl.u32 %v428, 7
    %v430 = vsub.s32 0, %v429
    %v431 = vrot.slane %v426, %v430
    %v432 = vlaneseq
    %v433 = vshrl.u32 %v432, 7
    %v434 = vsub.s32 1, %v433
    %v435 = vrot.slane %v426, %v434
    %v438 = vsel %vm324, %v421, 0
    %440 = vmatprep.subr.mxu0 0.0
    %441 = vmatpush1.msra.mxu0 0.0
    %442 = vmatprep.subr.mxu0 0.0
    %443 = vmatpush1.msra.mxu0 0.0
    %444 = vmatprep.subr.mxu0 0.0
    %445 = vmatpush1.msra.mxu0 0.0
    %446 = vmatprep.subr.mxu0 0.0
    %447 = vmatpush1.msra.mxu0 0.0
    %448 = vmatprep.subr.mxu0 0.0
    %449 = vmatpush1.msra.mxu0 0.0
    %450 = vmatprep.subr.mxu0 0.0
    %451 = vmatpush1.msra.mxu0 0.0
    %452 = vmatprep.subr.mxu0 0.0
    %453 = vmatpush1.msra.mxu0 0.0
    %454 = vmatprep.subr.mxu0 0.0
    %455 = vmatpush1.msra.mxu0 0.0
    %456 = vmatprep.subr.mxu0 %v259
    %457 = vmatpush1.msra.mxu0 %v258
    %458 = vmatprep.subr.mxu0 %v257
    %459 = vmatpush1.msra.mxu0 %v256
    %460 = vmatprep.subr.mxu0 %v255
    %461 = vmatpush1.msra.mxu0 %v254
    %462 = vmatprep.subr.mxu0 %v253
    %463 = vmatpush1.msra.mxu0 %v252
    %464 = vmatprep.subr.mxu0 %v251
    %465 = vmatpush1.msra.mxu0 %v250
    %466 = vmatprep.subr.mxu0 %v249
    %467 = vmatpush1.msra.mxu0 %v248
    %468 = vmatprep.subr.mxu0 %v247
    %469 = vmatpush1.msra.mxu0 %v246
    %470 = vmatprep.subr.mxu0 %v245
    %471 = vmatpush1.msra.mxu0 %v244
    %472 = vmatprep.subr.mxu0 0.0
    %473 = vmatpush2.msra.mxu0 0.0
    %474 = vmatprep.subr.mxu0 0.0
    %475 = vmatpush2.msra.mxu0 0.0
    %476 = vmatprep.subr.mxu0 0.0
    %477 = vmatpush2.msra.mxu0 0.0
    %478 = vmatprep.subr.mxu0 0.0
    %479 = vmatpush2.msra.mxu0 0.0
    %480 = vmatprep.subr.mxu0 0.0
    %481 = vmatpush2.msra.mxu0 0.0
    %482 = vmatprep.subr.mxu0 0.0
    %483 = vmatpush2.msra.mxu0 0.0
    %484 = vmatprep.subr.mxu0 0.0
    %485 = vmatpush2.msra.mxu0 0.0
    %486 = vmatprep.subr.mxu0 0.0
    %487 = vmatpush2.msra.mxu0 0.0
    %488 = vmatprep.subr.mxu0 0.0
    %489 = vmatpush2.msra.mxu0 0.0
    %490 = vmatprep.subr.mxu0 0.0
    %491 = vmatpush2.msra.mxu0 0.0
    %492 = vmatprep.subr.mxu0 0.0
    %493 = vmatpush2.msra.mxu0 0.0
    %494 = vmatprep.subr.mxu0 0.0
    %495 = vmatpush2.msra.mxu0 0.0
    %496 = vmatprep.subr.mxu0 0.0
    %497 = vmatpush2.msra.mxu0 0.0
    %498 = vmatprep.subr.mxu0 0.0
    %499 = vmatpush2.msra.mxu0 0.0
    %500 = vmatprep.subr.mxu0 0.0
    %501 = vmatpush2.msra.mxu0 0.0
    %502 = vmatprep.subr.mxu0 0.0
    %503 = vmatpush2.msra.mxu0 0.0
    %504 = vmatprep.mubr.f32.mxu0 0.0
    %505 = vmatmul.mubr.f32.gmra.mxu0 %v438
    %v506 = vpop.f32.mrf.mxu0
    %v507 = vadd.f32 %v431, %v506
    %v508 = vpop.f32.mrf.mxu0
    %v509 = vadd.f32 %v435, %v508
    %510 = vdwg.mxu0
    %v511 = vtanh.pop %v507
    %v512 = vtanh.pop %v509
    %v513 = vmul.f32 %v511, 0.5
    %v514 = vmul.f32 %v512, 0.5
    %v515 = vadd.f32 %v513, 0.5
    %v516 = vadd.f32 %v514, 0.5
    %v517 = vsel %vm267, %v511, %v515
    %v518 = vsel %vm268, %v512, %v516
    %v519 = vmul.f32 %v517, %v416
    %v520 = vmul.f32 %v517, %v518
    %522 = vrot.lane.b32.xlu0 %v520, 64
    %v523 = vpop.permute.xlu0 %522
    %v525 = vadd.f32 %v519, %v523
    %v526 = vtanh.pop %v525
    %v527 = vmul.f32 %v518, %v526
    %529 = vrot.lane.b32.xlu0 %v527, 64
    %v530 = vpop.permute.xlu0 %529
    %532 = vst.msk [vmem:[#allocation9 + $0x1] sm:$0x1] %vm423, %v530
    %s533 = scalar_lea.vmem [#allocation2], 3
    %v534 = vld [vmem:[%s533] ss:$8 sm:$0x3]
    %v536 = vlaneseq
    %v537 = vshrl.u32 %v536, 7
    %v538 = vsub.s32 0, %v537
    %v539 = vrot.slane %v534, %v538
    %v540 = vlaneseq
    %v541 = vshrl.u32 %v540, 7
    %v542 = vsub.s32 1, %v541
    %v543 = vrot.slane %v534, %v542
    %v546 = vsel %vm324, %v530, 0
    %548 = vmatprep.subr.mxu0 0.0
    %549 = vmatpush1.msra.mxu0 0.0
    %550 = vmatprep.subr.mxu0 0.0
    %551 = vmatpush1.msra.mxu0 0.0
    %552 = vmatprep.subr.mxu0 0.0
    %553 = vmatpush1.msra.mxu0 0.0
    %554 = vmatprep.subr.mxu0 0.0
    %555 = vmatpush1.msra.mxu0 0.0
    %556 = vmatprep.subr.mxu0 0.0
    %557 = vmatpush1.msra.mxu0 0.0
    %558 = vmatprep.subr.mxu0 0.0
    %559 = vmatpush1.msra.mxu0 0.0
    %560 = vmatprep.subr.mxu0 0.0
    %561 = vmatpush1.msra.mxu0 0.0
    %562 = vmatprep.subr.mxu0 0.0
    %563 = vmatpush1.msra.mxu0 0.0
    %564 = vmatprep.subr.mxu0 %v259
    %565 = vmatpush1.msra.mxu0 %v258
    %566 = vmatprep.subr.mxu0 %v257
    %567 = vmatpush1.msra.mxu0 %v256
    %568 = vmatprep.subr.mxu0 %v255
    %569 = vmatpush1.msra.mxu0 %v254
    %570 = vmatprep.subr.mxu0 %v253
    %571 = vmatpush1.msra.mxu0 %v252
    %572 = vmatprep.subr.mxu0 %v251
    %573 = vmatpush1.msra.mxu0 %v250
    %574 = vmatprep.subr.mxu0 %v249
    %575 = vmatpush1.msra.mxu0 %v248
    %576 = vmatprep.subr.mxu0 %v247
    %577 = vmatpush1.msra.mxu0 %v246
    %578 = vmatprep.subr.mxu0 %v245
    %579 = vmatpush1.msra.mxu0 %v244
    %580 = vmatprep.subr.mxu0 0.0
    %581 = vmatpush2.msra.mxu0 0.0
    %582 = vmatprep.subr.mxu0 0.0
    %583 = vmatpush2.msra.mxu0 0.0
    %584 = vmatprep.subr.mxu0 0.0
    %585 = vmatpush2.msra.mxu0 0.0
    %586 = vmatprep.subr.mxu0 0.0
    %587 = vmatpush2.msra.mxu0 0.0
    %588 = vmatprep.subr.mxu0 0.0
    %589 = vmatpush2.msra.mxu0 0.0
    %590 = vmatprep.subr.mxu0 0.0
    %591 = vmatpush2.msra.mxu0 0.0
    %592 = vmatprep.subr.mxu0 0.0
    %593 = vmatpush2.msra.mxu0 0.0
    %594 = vmatprep.subr.mxu0 0.0
    %595 = vmatpush2.msra.mxu0 0.0
    %596 = vmatprep.subr.mxu0 0.0
    %597 = vmatpush2.msra.mxu0 0.0
    %598 = vmatprep.subr.mxu0 0.0
    %599 = vmatpush2.msra.mxu0 0.0
    %600 = vmatprep.subr.mxu0 0.0
    %601 = vmatpush2.msra.mxu0 0.0
    %602 = vmatprep.subr.mxu0 0.0
    %603 = vmatpush2.msra.mxu0 0.0
    %604 = vmatprep.subr.mxu0 0.0
    %605 = vmatpush2.msra.mxu0 0.0
    %606 = vmatprep.subr.mxu0 0.0
    %607 = vmatpush2.msra.mxu0 0.0
    %608 = vmatprep.subr.mxu0 0.0
    %609 = vmatpush2.msra.mxu0 0.0
    %610 = vmatprep.subr.mxu0 0.0
    %611 = vmatpush2.msra.mxu0 0.0
    %612 = vmatprep.mubr.f32.mxu0 0.0
    %613 = vmatmul.mubr.f32.gmra.mxu0 %v546
    %v614 = vpop.f32.mrf.mxu0
    %v615 = vadd.f32 %v539, %v614
    %v616 = vpop.f32.mrf.mxu0
    %v617 = vadd.f32 %v543, %v616
    %618 = vdwg.mxu0
    %v619 = vtanh.pop %v615
    %v620 = vtanh.pop %v617
    %v621 = vmul.f32 %v619, 0.5
    %v622 = vmul.f32 %v620, 0.5
    %v623 = vadd.f32 %v621, 0.5
    %v624 = vadd.f32 %v622, 0.5
    %v625 = vsel %vm267, %v619, %v623
    %v626 = vsel %vm268, %v620, %v624
    %v627 = vmul.f32 %v625, %v525
    %v628 = vmul.f32 %v625, %v626
    %630 = vrot.lane.b32.xlu0 %v628, 64
    %v631 = vpop.permute.xlu0 %630
    %v633 = vadd.f32 %v627, %v631
    %v634 = vtanh.pop %v633
    %v635 = vmul.f32 %v626, %v634
    %637 = vrot.lane.b32.xlu0 %v635, 64
    %v638 = vpop.permute.xlu0 %637
    %640 = vst.msk [vmem:[#allocation9 + $0x2] sm:$0x1] %vm423, %v638
    %s641 = scalar_lea.vmem [#allocation2], 4
    %v642 = vld [vmem:[%s641] ss:$8 sm:$0x3]
    %v644 = vlaneseq
    %v645 = vshrl.u32 %v644, 7
    %v646 = vsub.s32 0, %v645
    %v647 = vrot.slane %v642, %v646
    %v648 = vlaneseq
    %v649 = vshrl.u32 %v648, 7
    %v650 = vsub.s32 1, %v649
    %v651 = vrot.slane %v642, %v650
    %v654 = vsel %vm324, %v638, 0
    %656 = vmatprep.subr.mxu0 0.0
    %657 = vmatpush1.msra.mxu0 0.0
    %658 = vmatprep.subr.mxu0 0.0
    %659 = vmatpush1.msra.mxu0 0.0
    %660 = vmatprep.subr.mxu0 0.0
    %661 = vmatpush1.msra.mxu0 0.0
    %662 = vmatprep.subr.mxu0 0.0
    %663 = vmatpush1.msra.mxu0 0.0
    %664 = vmatprep.subr.mxu0 0.0
    %665 = vmatpush1.msra.mxu0 0.0
    %666 = vmatprep.subr.mxu0 0.0
    %667 = vmatpush1.msra.mxu0 0.0
    %668 = vmatprep.subr.mxu0 0.0
    %669 = vmatpush1.msra.mxu0 0.0
    %670 = vmatprep.subr.mxu0 0.0
    %671 = vmatpush1.msra.mxu0 0.0
    %672 = vmatprep.subr.mxu0 %v259
    %673 = vmatpush1.msra.mxu0 %v258
    %674 = vmatprep.subr.mxu0 %v257
    %675 = vmatpush1.msra.mxu0 %v256
    %676 = vmatprep.subr.mxu0 %v255
    %677 = vmatpush1.msra.mxu0 %v254
    %678 = vmatprep.subr.mxu0 %v253
    %679 = vmatpush1.msra.mxu0 %v252
    %680 = vmatprep.subr.mxu0 %v251
    %681 = vmatpush1.msra.mxu0 %v250
    %682 = vmatprep.subr.mxu0 %v249
    %683 = vmatpush1.msra.mxu0 %v248
    %684 = vmatprep.subr.mxu0 %v247
    %685 = vmatpush1.msra.mxu0 %v246
    %686 = vmatprep.subr.mxu0 %v245
    %687 = vmatpush1.msra.mxu0 %v244
    %688 = vmatprep.subr.mxu0 0.0
    %689 = vmatpush2.msra.mxu0 0.0
    %690 = vmatprep.subr.mxu0 0.0
    %691 = vmatpush2.msra.mxu0 0.0
    %692 = vmatprep.subr.mxu0 0.0
    %693 = vmatpush2.msra.mxu0 0.0
    %694 = vmatprep.subr.mxu0 0.0
    %695 = vmatpush2.msra.mxu0 0.0
    %696 = vmatprep.subr.mxu0 0.0
    %697 = vmatpush2.msra.mxu0 0.0
    %698 = vmatprep.subr.mxu0 0.0
    %699 = vmatpush2.msra.mxu0 0.0
    %700 = vmatprep.subr.mxu0 0.0
    %701 = vmatpush2.msra.mxu0 0.0
    %702 = vmatprep.subr.mxu0 0.0
    %703 = vmatpush2.msra.mxu0 0.0
    %704 = vmatprep.subr.mxu0 0.0
    %705 = vmatpush2.msra.mxu0 0.0
    %706 = vmatprep.subr.mxu0 0.0
    %707 = vmatpush2.msra.mxu0 0.0
    %708 = vmatprep.subr.mxu0 0.0
    %709 = vmatpush2.msra.mxu0 0.0
    %710 = vmatprep.subr.mxu0 0.0
    %711 = vmatpush2.msra.mxu0 0.0
    %712 = vmatprep.subr.mxu0 0.0
    %713 = vmatpush2.msra.mxu0 0.0
    %714 = vmatprep.subr.mxu0 0.0
    %715 = vmatpush2.msra.mxu0 0.0
    %716 = vmatprep.subr.mxu0 0.0
    %717 = vmatpush2.msra.mxu0 0.0
    %718 = vmatprep.subr.mxu0 0.0
    %719 = vmatpush2.msra.mxu0 0.0
    %720 = vmatprep.mubr.f32.mxu0 0.0
    %721 = vmatmul.mubr.f32.gmra.mxu0 %v654
    %v722 = vpop.f32.mrf.mxu0
    %v723 = vadd.f32 %v647, %v722
    %v724 = vpop.f32.mrf.mxu0
    %v725 = vadd.f32 %v651, %v724
    %726 = vdwg.mxu0
    %v727 = vtanh.pop %v723
    %v728 = vtanh.pop %v725
    %v729 = vmul.f32 %v727, 0.5
    %v730 = vmul.f32 %v728, 0.5
    %v731 = vadd.f32 %v729, 0.5
    %v732 = vadd.f32 %v730, 0.5
    %v733 = vsel %vm267, %v727, %v731
    %v734 = vsel %vm268, %v728, %v732
    %v735 = vmul.f32 %v733, %v633
    %v736 = vmul.f32 %v733, %v734
    %738 = vrot.lane.b32.xlu0 %v736, 64
    %v739 = vpop.permute.xlu0 %738
    %v741 = vadd.f32 %v735, %v739
    %v742 = vtanh.pop %v741
    %v743 = vmul.f32 %v734, %v742
    %745 = vrot.lane.b32.xlu0 %v743, 64
    %v746 = vpop.permute.xlu0 %745
    %748 = vst.msk [vmem:[#allocation9 + $0x3] sm:$0x1] %vm423, %v746
    %s749 = scalar_lea.vmem [#allocation2], 5
    %v750 = vld [vmem:[%s749] ss:$8 sm:$0x3]
    %v752 = vlaneseq
    %v753 = vshrl.u32 %v752, 7
    %v754 = vsub.s32 0, %v753
    %v755 = vrot.slane %v750, %v754
    %v756 = vlaneseq
    %v757 = vshrl.u32 %v756, 7
    %v758 = vsub.s32 1, %v757
    %v759 = vrot.slane %v750, %v758
    %v762 = vsel %vm324, %v746, 0
    %764 = vmatprep.subr.mxu0 0.0
    %765 = vmatpush1.msra.mxu0 0.0
    %766 = vmatprep.subr.mxu0 0.0
    %767 = vmatpush1.msra.mxu0 0.0
    %768 = vmatprep.subr.mxu0 0.0
    %769 = vmatpush1.msra.mxu0 0.0
    %770 = vmatprep.subr.mxu0 0.0
    %771 = vmatpush1.msra.mxu0 0.0
    %772 = vmatprep.subr.mxu0 0.0
    %773 = vmatpush1.msra.mxu0 0.0
    %774 = vmatprep.subr.mxu0 0.0
    %775 = vmatpush1.msra.mxu0 0.0
    %776 = vmatprep.subr.mxu0 0.0
    %777 = vmatpush1.msra.mxu0 0.0
    %778 = vmatprep.subr.mxu0 0.0
    %779 = vmatpush1.msra.mxu0 0.0
    %780 = vmatprep.subr.mxu0 %v259
    %781 = vmatpush1.msra.mxu0 %v258
    %782 = vmatprep.subr.mxu0 %v257
    %783 = vmatpush1.msra.mxu0 %v256
    %784 = vmatprep.subr.mxu0 %v255
    %785 = vmatpush1.msra.mxu0 %v254
    %786 = vmatprep.subr.mxu0 %v253
    %787 = vmatpush1.msra.mxu0 %v252
    %788 = vmatprep.subr.mxu0 %v251
    %789 = vmatpush1.msra.mxu0 %v250
    %790 = vmatprep.subr.mxu0 %v249
    %791 = vmatpush1.msra.mxu0 %v248
    %792 = vmatprep.subr.mxu0 %v247
    %793 = vmatpush1.msra.mxu0 %v246
    %794 = vmatprep.subr.mxu0 %v245
    %795 = vmatpush1.msra.mxu0 %v244
    %796 = vmatprep.subr.mxu0 0.0
    %797 = vmatpush2.msra.mxu0 0.0
    %798 = vmatprep.subr.mxu0 0.0
    %799 = vmatpush2.msra.mxu0 0.0
    %800 = vmatprep.subr.mxu0 0.0
    %801 = vmatpush2.msra.mxu0 0.0
    %802 = vmatprep.subr.mxu0 0.0
    %803 = vmatpush2.msra.mxu0 0.0
    %804 = vmatprep.subr.mxu0 0.0
    %805 = vmatpush2.msra.mxu0 0.0
    %806 = vmatprep.subr.mxu0 0.0
    %807 = vmatpush2.msra.mxu0 0.0
    %808 = vmatprep.subr.mxu0 0.0
    %809 = vmatpush2.msra.mxu0 0.0
    %810 = vmatprep.subr.mxu0 0.0
    %811 = vmatpush2.msra.mxu0 0.0
    %812 = vmatprep.subr.mxu0 0.0
    %813 = vmatpush2.msra.mxu0 0.0
    %814 = vmatprep.subr.mxu0 0.0
    %815 = vmatpush2.msra.mxu0 0.0
    %816 = vmatprep.subr.mxu0 0.0
    %817 = vmatpush2.msra.mxu0 0.0
    %818 = vmatprep.subr.mxu0 0.0
    %819 = vmatpush2.msra.mxu0 0.0
    %820 = vmatprep.subr.mxu0 0.0
    %821 = vmatpush2.msra.mxu0 0.0
    %822 = vmatprep.subr.mxu0 0.0
    %823 = vmatpush2.msra.mxu0 0.0
    %824 = vmatprep.subr.mxu0 0.0
    %825 = vmatpush2.msra.mxu0 0.0
    %826 = vmatprep.subr.mxu0 0.0
    %827 = vmatpush2.msra.mxu0 0.0
    %828 = vmatprep.mubr.f32.mxu0 0.0
    %829 = vmatmul.mubr.f32.gmra.mxu0 %v762
    %v830 = vpop.f32.mrf.mxu0
    %v831 = vadd.f32 %v755, %v830
    %v832 = vpop.f32.mrf.mxu0
    %v833 = vadd.f32 %v759, %v832
    %834 = vdwg.mxu0
    %v835 = vtanh.pop %v831
    %v836 = vtanh.pop %v833
    %v837 = vmul.f32 %v835, 0.5
    %v838 = vmul.f32 %v836, 0.5
    %v839 = vadd.f32 %v837, 0.5
    %v840 = vadd.f32 %v838, 0.5
    %v841 = vsel %vm267, %v835, %v839
    %v842 = vsel %vm268, %v836, %v840
    %v843 = vmul.f32 %v841, %v741
    %v844 = vmul.f32 %v841, %v842
    %846 = vrot.lane.b32.xlu0 %v844, 64
    %v847 = vpop.permute.xlu0 %846
    %v849 = vadd.f32 %v843, %v847
    %v850 = vtanh.pop %v849
    %v851 = vmul.f32 %v842, %v850
    %853 = vrot.lane.b32.xlu0 %v851, 64
    %v854 = vpop.permute.xlu0 %853
    %856 = vst.msk [vmem:[#allocation9 + $0x4] sm:$0x1] %vm423, %v854
    %s857 = scalar_lea.vmem [#allocation2], 6
    %v858 = vld [vmem:[%s857] ss:$8 sm:$0x3]
    %v860 = vlaneseq
    %v861 = vshrl.u32 %v860, 7
    %v862 = vsub.s32 0, %v861
    %v863 = vrot.slane %v858, %v862
    %v864 = vlaneseq
    %v865 = vshrl.u32 %v864, 7
    %v866 = vsub.s32 1, %v865
    %v867 = vrot.slane %v858, %v866
    %v870 = vsel %vm324, %v854, 0
    %872 = vmatprep.subr.mxu0 0.0
    %873 = vmatpush1.msra.mxu0 0.0
    %874 = vmatprep.subr.mxu0 0.0
    %875 = vmatpush1.msra.mxu0 0.0
    %876 = vmatprep.subr.mxu0 0.0
    %877 = vmatpush1.msra.mxu0 0.0
    %878 = vmatprep.subr.mxu0 0.0
    %879 = vmatpush1.msra.mxu0 0.0
    %880 = vmatprep.subr.mxu0 0.0
    %881 = vmatpush1.msra.mxu0 0.0
    %882 = vmatprep.subr.mxu0 0.0
    %883 = vmatpush1.msra.mxu0 0.0
    %884 = vmatprep.subr.mxu0 0.0
    %885 = vmatpush1.msra.mxu0 0.0
    %886 = vmatprep.subr.mxu0 0.0
    %887 = vmatpush1.msra.mxu0 0.0
    %888 = vmatprep.subr.mxu0 %v259
    %889 = vmatpush1.msra.mxu0 %v258
    %890 = vmatprep.subr.mxu0 %v257
    %891 = vmatpush1.msra.mxu0 %v256
    %892 = vmatprep.subr.mxu0 %v255
    %893 = vmatpush1.msra.mxu0 %v254
    %894 = vmatprep.subr.mxu0 %v253
    %895 = vmatpush1.msra.mxu0 %v252
    %896 = vmatprep.subr.mxu0 %v251
    %897 = vmatpush1.msra.mxu0 %v250
    %898 = vmatprep.subr.mxu0 %v249
    %899 = vmatpush1.msra.mxu0 %v248
    %900 = vmatprep.subr.mxu0 %v247
    %901 = vmatpush1.msra.mxu0 %v246
    %902 = vmatprep.subr.mxu0 %v245
    %903 = vmatpush1.msra.mxu0 %v244
    %904 = vmatprep.subr.mxu0 0.0
    %905 = vmatpush2.msra.mxu0 0.0
    %906 = vmatprep.subr.mxu0 0.0
    %907 = vmatpush2.msra.mxu0 0.0
    %908 = vmatprep.subr.mxu0 0.0
    %909 = vmatpush2.msra.mxu0 0.0
    %910 = vmatprep.subr.mxu0 0.0
    %911 = vmatpush2.msra.mxu0 0.0
    %912 = vmatprep.subr.mxu0 0.0
    %913 = vmatpush2.msra.mxu0 0.0
    %914 = vmatprep.subr.mxu0 0.0
    %915 = vmatpush2.msra.mxu0 0.0
    %916 = vmatprep.subr.mxu0 0.0
    %917 = vmatpush2.msra.mxu0 0.0
    %918 = vmatprep.subr.mxu0 0.0
    %919 = vmatpush2.msra.mxu0 0.0
    %920 = vmatprep.subr.mxu0 0.0
    %921 = vmatpush2.msra.mxu0 0.0
    %922 = vmatprep.subr.mxu0 0.0
    %923 = vmatpush2.msra.mxu0 0.0
    %924 = vmatprep.subr.mxu0 0.0
    %925 = vmatpush2.msra.mxu0 0.0
    %926 = vmatprep.subr.mxu0 0.0
    %927 = vmatpush2.msra.mxu0 0.0
    %928 = vmatprep.subr.mxu0 0.0
    %929 = vmatpush2.msra.mxu0 0.0
    %930 = vmatprep.subr.mxu0 0.0
    %931 = vmatpush2.msra.mxu0 0.0
    %932 = vmatprep.subr.mxu0 0.0
    %933 = vmatpush2.msra.mxu0 0.0
    %934 = vmatprep.subr.mxu0 0.0
    %935 = vmatpush2.msra.mxu0 0.0
    %936 = vmatprep.mubr.f32.mxu0 0.0
    %937 = vmatmul.mubr.f32.gmra.mxu0 %v870
    %v938 = vpop.f32.mrf.mxu0
    %v939 = vadd.f32 %v863, %v938
    %v940 = vpop.f32.mrf.mxu0
    %v941 = vadd.f32 %v867, %v940
    %942 = vdwg.mxu0
    %v943 = vtanh.pop %v939
    %v944 = vtanh.pop %v941
    %v945 = vmul.f32 %v943, 0.5
    %v946 = vmul.f32 %v944, 0.5
    %v947 = vadd.f32 %v945, 0.5
    %v948 = vadd.f32 %v946, 0.5
    %v949 = vsel %vm267, %v943, %v947
    %v950 = vsel %vm268, %v944, %v948
    %v951 = vmul.f32 %v949, %v849
    %v952 = vmul.f32 %v949, %v950
    %954 = vrot.lane.b32.xlu0 %v952, 64
    %v955 = vpop.permute.xlu0 %954
    %v957 = vadd.f32 %v951, %v955
    %v958 = vtanh.pop %v957
    %v959 = vmul.f32 %v950, %v958
    %961 = vrot.lane.b32.xlu0 %v959, 64
    %v962 = vpop.permute.xlu0 %961
    %964 = vst.msk [vmem:[#allocation9 + $0x5] sm:$0x1] %vm423, %v962
    %s965 = scalar_lea.vmem [#allocation2], 7
    %v966 = vld [vmem:[%s965] ss:$8 sm:$0x3]
    %v968 = vlaneseq
    %v969 = vshrl.u32 %v968, 7
    %v970 = vsub.s32 0, %v969
    %v971 = vrot.slane %v966, %v970
    %v972 = vlaneseq
    %v973 = vshrl.u32 %v972, 7
    %v974 = vsub.s32 1, %v973
    %v975 = vrot.slane %v966, %v974
    %v978 = vsel %vm324, %v962, 0
    %980 = vmatprep.subr.mxu0 0.0
    %981 = vmatpush1.msra.mxu0 0.0
    %982 = vmatprep.subr.mxu0 0.0
    %983 = vmatpush1.msra.mxu0 0.0
    %984 = vmatprep.subr.mxu0 0.0
    %985 = vmatpush1.msra.mxu0 0.0
    %986 = vmatprep.subr.mxu0 0.0
    %987 = vmatpush1.msra.mxu0 0.0
    %988 = vmatprep.subr.mxu0 0.0
    %989 = vmatpush1.msra.mxu0 0.0
    %990 = vmatprep.subr.mxu0 0.0
    %991 = vmatpush1.msra.mxu0 0.0
    %992 = vmatprep.subr.mxu0 0.0
    %993 = vmatpush1.msra.mxu0 0.0
    %994 = vmatprep.subr.mxu0 0.0
    %995 = vmatpush1.msra.mxu0 0.0
    %996 = vmatprep.subr.mxu0 %v259
    %997 = vmatpush1.msra.mxu0 %v258
    %998 = vmatprep.subr.mxu0 %v257
    %999 = vmatpush1.msra.mxu0 %v256
    %1000 = vmatprep.subr.mxu0 %v255
    %1001 = vmatpush1.msra.mxu0 %v254
    %1002 = vmatprep.subr.mxu0 %v253
    %1003 = vmatpush1.msra.mxu0 %v252
    %1004 = vmatprep.subr.mxu0 %v251
    %1005 = vmatpush1.msra.mxu0 %v250
    %1006 = vmatprep.subr.mxu0 %v249
    %1007 = vmatpush1.msra.mxu0 %v248
    %1008 = vmatprep.subr.mxu0 %v247
    %1009 = vmatpush1.msra.mxu0 %v246
    %1010 = vmatprep.subr.mxu0 %v245
    %1011 = vmatpush1.msra.mxu0 %v244
    %1012 = vmatprep.subr.mxu0 0.0
    %1013 = vmatpush2.msra.mxu0 0.0
    %1014 = vmatprep.subr.mxu0 0.0
    %1015 = vmatpush2.msra.mxu0 0.0
    %1016 = vmatprep.subr.mxu0 0.0
    %1017 = vmatpush2.msra.mxu0 0.0
    %1018 = vmatprep.subr.mxu0 0.0
    %1019 = vmatpush2.msra.mxu0 0.0
    %1020 = vmatprep.subr.mxu0 0.0
    %1021 = vmatpush2.msra.mxu0 0.0
    %1022 = vmatprep.subr.mxu0 0.0
    %1023 = vmatpush2.msra.mxu0 0.0
    %1024 = vmatprep.subr.mxu0 0.0
    %1025 = vmatpush2.msra.mxu0 0.0
    %1026 = vmatprep.subr.mxu0 0.0
    %1027 = vmatpush2.msra.mxu0 0.0
    %1028 = vmatprep.subr.mxu0 0.0
    %1029 = vmatpush2.msra.mxu0 0.0
    %1030 = vmatprep.subr.mxu0 0.0
    %1031 = vmatpush2.msra.mxu0 0.0
    %1032 = vmatprep.subr.mxu0 0.0
    %1033 = vmatpush2.msra.mxu0 0.0
    %1034 = vmatprep.subr.mxu0 0.0
    %1035 = vmatpush2.msra.mxu0 0.0
    %1036 = vmatprep.subr.mxu0 0.0
    %1037 = vmatpush2.msra.mxu0 0.0
    %1038 = vmatprep.subr.mxu0 0.0
    %1039 = vmatpush2.msra.mxu0 0.0
    %1040 = vmatprep.subr.mxu0 0.0
    %1041 = vmatpush2.msra.mxu0 0.0
    %1042 = vmatprep.subr.mxu0 0.0
    %1043 = vmatpush2.msra.mxu0 0.0
    %1044 = vmatprep.mubr.f32.mxu0 0.0
    %1045 = vmatmul.mubr.f32.gmra.mxu0 %v978
    %v1046 = vpop.f32.mrf.mxu0
    %v1047 = vadd.f32 %v971, %v1046
    %v1048 = vpop.f32.mrf.mxu0
    %v1049 = vadd.f32 %v975, %v1048
    %1050 = vdwg.mxu0
    %v1051 = vtanh.pop %v1047
    %v1052 = vtanh.pop %v1049
    %v1053 = vmul.f32 %v1051, 0.5
    %v1054 = vmul.f32 %v1052, 0.5
    %v1055 = vadd.f32 %v1053, 0.5
    %v1056 = vadd.f32 %v1054, 0.5
    %v1057 = vsel %vm267, %v1051, %v1055
    %v1058 = vsel %vm268, %v1052, %v1056
    %v1059 = vmul.f32 %v1057, %v957
    %v1060 = vmul.f32 %v1057, %v1058
    %1062 = vrot.lane.b32.xlu0 %v1060, 64
    %v1063 = vpop.permute.xlu0 %1062
    %v1065 = vadd.f32 %v1059, %v1063
    %v1066 = vtanh.pop %v1065
    %v1067 = vmul.f32 %v1058, %v1066
    %1069 = vrot.lane.b32.xlu0 %v1067, 64
    %v1070 = vpop.permute.xlu0 %1069
    %1072 = vst.msk [vmem:[#allocation9 + $0x6] sm:$0x1] %vm423, %v1070
    %v1073 = vld [vmem:[%s241] ss:$8 sm:$0x3]
    %v1075 = vlaneseq
    %v1076 = vshrl.u32 %v1075, 7
    %v1077 = vsub.s32 0, %v1076
    %v1078 = vrot.slane %v1073, %v1077
    %v1079 = vlaneseq
    %v1080 = vshrl.u32 %v1079, 7
    %v1081 = vsub.s32 1, %v1080
    %v1082 = vrot.slane %v1073, %v1081
    %v1085 = vsel %vm324, %v1070, 0
    %1087 = vmatprep.subr.mxu0 0.0
    %1088 = vmatpush1.msra.mxu0 0.0
    %1089 = vmatprep.subr.mxu0 0.0
    %1090 = vmatpush1.msra.mxu0 0.0
    %1091 = vmatprep.subr.mxu0 0.0
    %1092 = vmatpush1.msra.mxu0 0.0
    %1093 = vmatprep.subr.mxu0 0.0
    %1094 = vmatpush1.msra.mxu0 0.0
    %1095 = vmatprep.subr.mxu0 0.0
    %1096 = vmatpush1.msra.mxu0 0.0
    %1097 = vmatprep.subr.mxu0 0.0
    %1098 = vmatpush1.msra.mxu0 0.0
    %1099 = vmatprep.subr.mxu0 0.0
    %1100 = vmatpush1.msra.mxu0 0.0
    %1101 = vmatprep.subr.mxu0 0.0
    %1102 = vmatpush1.msra.mxu0 0.0
    %1103 = vmatprep.subr.mxu0 %v259
    %1104 = vmatpush1.msra.mxu0 %v258
    %1105 = vmatprep.subr.mxu0 %v257
    %1106 = vmatpush1.msra.mxu0 %v256
    %1107 = vmatprep.subr.mxu0 %v255
    %1108 = vmatpush1.msra.mxu0 %v254
    %1109 = vmatprep.subr.mxu0 %v253
    %1110 = vmatpush1.msra.mxu0 %v252
    %1111 = vmatprep.subr.mxu0 %v251
    %1112 = vmatpush1.msra.mxu0 %v250
    %1113 = vmatprep.subr.mxu0 %v249
    %1114 = vmatpush1.msra.mxu0 %v248
    %1115 = vmatprep.subr.mxu0 %v247
    %1116 = vmatpush1.msra.mxu0 %v246
    %1117 = vmatprep.subr.mxu0 %v245
    %1118 = vmatpush1.msra.mxu0 %v244
    %1119 = vmatprep.subr.mxu0 0.0
    %1120 = vmatpush2.msra.mxu0 0.0
    %1121 = vmatprep.subr.mxu0 0.0
    %1122 = vmatpush2.msra.mxu0 0.0
    %1123 = vmatprep.subr.mxu0 0.0
    %1124 = vmatpush2.msra.mxu0 0.0
    %1125 = vmatprep.subr.mxu0 0.0
    %1126 = vmatpush2.msra.mxu0 0.0
    %1127 = vmatprep.subr.mxu0 0.0
    %1128 = vmatpush2.msra.mxu0 0.0
    %1129 = vmatprep.subr.mxu0 0.0
    %1130 = vmatpush2.msra.mxu0 0.0
    %1131 = vmatprep.subr.mxu0 0.0
    %1132 = vmatpush2.msra.mxu0 0.0
    %1133 = vmatprep.subr.mxu0 0.0
    %1134 = vmatpush2.msra.mxu0 0.0
    %1135 = vmatprep.subr.mxu0 0.0
    %1136 = vmatpush2.msra.mxu0 0.0
    %1137 = vmatprep.subr.mxu0 0.0
    %1138 = vmatpush2.msra.mxu0 0.0
    %1139 = vmatprep.subr.mxu0 0.0
    %1140 = vmatpush2.msra.mxu0 0.0
    %1141 = vmatprep.subr.mxu0 0.0
    %1142 = vmatpush2.msra.mxu0 0.0
    %1143 = vmatprep.subr.mxu0 0.0
    %1144 = vmatpush2.msra.mxu0 0.0
    %1145 = vmatprep.subr.mxu0 0.0
    %1146 = vmatpush2.msra.mxu0 0.0
    %1147 = vmatprep.subr.mxu0 0.0
    %1148 = vmatpush2.msra.mxu0 0.0
    %1149 = vmatprep.subr.mxu0 0.0
    %1150 = vmatpush2.msra.mxu0 0.0
    %1151 = vmatprep.mubr.f32.mxu0 0.0
    %1152 = vmatmul.mubr.f32.gmra.mxu0 %v1085
    %v1153 = vpop.f32.mrf.mxu0
    %v1154 = vadd.f32 %v1078, %v1153
    %v1155 = vpop.f32.mrf.mxu0
    %v1156 = vadd.f32 %v1082, %v1155
    %1157 = vdwg.mxu0
    %v1158 = vtanh.pop %v1154
    %v1159 = vtanh.pop %v1156
    %v1160 = vmul.f32 %v1158, 0.5
    %v1161 = vmul.f32 %v1159, 0.5
    %v1162 = vadd.f32 %v1160, 0.5
    %v1163 = vadd.f32 %v1161, 0.5
    %v1164 = vsel %vm267, %v1158, %v1162
    %v1165 = vsel %vm268, %v1159, %v1163
    %v1166 = vmul.f32 %v1164, %v1065
    %v1167 = vmul.f32 %v1164, %v1165
    %1169 = vrot.lane.b32.xlu0 %v1167, 64
    %v1170 = vpop.permute.xlu0 %1169
    %v1172 = vadd.f32 %v1166, %v1170
    %v1173 = vtanh.pop %v1172
    %v1174 = vmul.f32 %v1165, %v1173
    %1176 = vrot.lane.b32.xlu0 %v1174, 64
    %v1177 = vpop.permute.xlu0 %1176
    %1179 = vst.msk [vmem:[#allocation9 + $0x7] sm:$0x1] %vm423, %v1177
    // Predicated region
    $region26: #{tpu_custom_call.1} parent=1 // pred_check
      _
    $region27: #{tpu_custom_call.1} parent=1 // pred_check_branch
      %1181 = sbr.rel (0) target = $region29
    $region28: #{tpu_custom_call.1} parent=1 // pred_region
      %s1183 = ssub.s32 128, 128
      %1184 = vsyncadd [#allocation5], %s1183
      %s1186 = sshll.u32 [#allocation9], 4
      %s1187 = int_to_ptr.vmem [resolvable:$true] %s1186
      %1189 = dma.vmem_to_hbm [thread:$0]  %s1187, 128, %s3, [#allocation5]
    $region29: #{tpu_custom_call.1} parent=1 // pred_fallthru
      _
    // Predicated region
    $region30: #{tpu_custom_call.1} parent=1 // pred_check
      _
    $region31: #{tpu_custom_call.1} parent=1 // pred_check_branch
      %1191 = sbr.rel (0) target = $region33
    $region32: #{tpu_custom_call.1} parent=1 // pred_region
      %1192 = dma.done [#allocation5], 128
    $region33: #{tpu_custom_call.1} parent=1 // pred_fallthru
      _
    %1193 = vsyncpa [#allocation4], 1
    %1194 = vsyncpa [#allocation7], 1
    %1195 = vsyncpa [#allocation5], 1

</llo_original>
